<compile_context>
chip_gen: v7x
topology: tpu7x:2x2x1
jax: 0.10.0
libtpu: 0.0.40
codegen_flags: <defaults>
</compile_context>

<pallas_src>
import math
import functools

import jax
import jax.numpy as jnp
from jax.experimental import pallas as pl
from jax.experimental.pallas import tpu as pltpu


HIDDEN = 512  # fc7 output width, fixed by the module


def _round_up(v, m):
    return (v + m - 1) // m * m


def make_vcop_kernel(tuple_len: int):
    pairs = [(i, j) for i in range(tuple_len) for j in range(i + 1, tuple_len)]

    def kernel(x_ref, w7t_ref, w7b_ref, b7_ref, w8_ref, b8_ref, o_ref):
        # x_ref: [T, TILE_B, F]  (frame-major so per-frame rows are contiguous)
        t, tb, f = x_ref.shape
        x = x_ref[...].reshape(t * tb, f)                    # leading-dim merge, no lane shuffle

        # Per-frame projections for all frames at once:
        #   fc7([xi ; xj]) == xi @ W7_top + xj @ W7_bot + b7
        a = jnp.dot(x, w7t_ref[...], preferred_element_type=jnp.float32)   # [T*TILE_B, 512]
        a = a + b7_ref[...]                                  # fold fc7 bias once (not per pair)
        c = jnp.dot(x, w7b_ref[...], preferred_element_type=jnp.float32)   # [T*TILE_B, 512]

        # fc8 accumulated per pair -> never build the [TILE_B, 512*P] concat.
        acc = None
        for p, (i, j) in enumerate(pairs):                   # static unrolled pair loop
            pf = jnp.maximum(a[i * tb:(i + 1) * tb] + c[j * tb:(j + 1) * tb], 0.0)
            contrib = jnp.dot(pf, w8_ref[p], preferred_element_type=jnp.float32)
            acc = contrib if acc is None else acc + contrib

        # dropout(p=0.5): identity (eval mode).
        o_ref[...] = (acc + b8_ref[...]).astype(o_ref.dtype)

    return kernel


@functools.partial(jax.jit, static_argnames=("tuple_len", "tile_b"))
def vcop_header(x, w7, b7, w8, b8, *, tuple_len, tile_b=None):
    """VCOPHeader forward.  x: [B, T, F] float32 -> [B, tuple_len!] float32.

    Weights are stored transposed vs. torch ([in, out]):
      w7: [2F, 512], b7: [512], w8: [512*P, class_num], b8: [class_num].
    """
    B, T, F = x.shape
    assert T == tuple_len
    pair_num = tuple_len * (tuple_len - 1) // 2
    class_num = w8.shape[1]
    assert w7.shape == (2 * F, HIDDEN)
    assert w8.shape[0] == HIDDEN * pair_num

    # ---- layout plumbing (XLA side, outside the kernel) ----
    n_pad = _round_up(class_num, 128)                  # lane-dense output store
    if tile_b is None:
        tile_b = min(512, _round_up(max(B, 8), 8))     # f32 sublane multiple, big tiles pipeline well
    b_pad = _round_up(B, tile_b)

    x_p = x.astype(jnp.float32)
    if b_pad != B:
        x_p = jnp.pad(x_p, ((0, b_pad - B), (0, 0), (0, 0)))
    x_p = jnp.transpose(x_p, (1, 0, 2))                # [T, Bp, F]: per-frame rows contiguous

    w7_top = w7[:F]                                    # [F, 512]
    w7_bot = w7[F:]                                    # [F, 512]
    b7_2d = b7.reshape(1, HIDDEN)
    w8_p = jnp.pad(w8, ((0, 0), (0, n_pad - class_num)))
    w8_p = w8_p.reshape(pair_num, HIDDEN, n_pad)       # per-pair fc8 chunks
    b8_p = jnp.pad(b8, (0, n_pad - class_num)).reshape(1, n_pad)

    const2 = lambda b: (0, 0)
    out_padded = pl.pallas_call(
        make_vcop_kernel(tuple_len),
        out_shape=jax.ShapeDtypeStruct((b_pad, n_pad), jnp.float32),
        grid_spec=pltpu.PrefetchScalarGridSpec(
            num_scalar_prefetch=0,
            grid=(b_pad // tile_b,),
            in_specs=[
                pl.BlockSpec((tuple_len, tile_b, F), lambda b: (0, b, 0)),    # x batch tile
                pl.BlockSpec((F, HIDDEN), const2),                            # W7 top (VMEM-resident)
                pl.BlockSpec((F, HIDDEN), const2),                            # W7 bot (VMEM-resident)
                pl.BlockSpec((1, HIDDEN), const2),                            # b7
                pl.BlockSpec((pair_num, HIDDEN, n_pad), lambda b: (0, 0, 0)), # W8 chunks (resident)
                pl.BlockSpec((1, n_pad), const2),                             # b8
            ],
            out_specs=pl.BlockSpec((tile_b, n_pad), lambda b: (b, 0)),
        ),
        compiler_params=pltpu.CompilerParams(
            dimension_semantics=("parallel",),          # shard batch tiles across TCs (v7x)
        ),
    )(x_p, w7_top, w7_bot, b7_2d, w8_p, b8_p)

    return out_padded[:B, :class_num]


def reference(x, w7, b7, w8, b8, *, tuple_len):
    hp = jax.lax.Precision.HIGHEST
    pf = []
    for i in range(tuple_len):
        for j in range(i + 1, tuple_len):
            cat = jnp.concatenate([x[:, i], x[:, j]], axis=1)
            pf.append(jax.nn.relu(jnp.dot(cat, w7, precision=hp) + b7))
    h = jnp.concatenate(pf, axis=1)
    return jnp.dot(h, w8, precision=hp) + b8


if __name__ == "__main__":
    # Small, module-consistent shapes (F multiple of 128 for lane density).
    tuple_len = 3
    feature_size = 128
    pair_num = tuple_len * (tuple_len - 1) // 2       # 3
    class_num = math.factorial(tuple_len)             # 6
    B = 36                                            # not a tile multiple -> exercises padding

    key = jax.random.PRNGKey(0)
    kx, k7w, k7b, k8w, k8b = jax.random.split(key, 5)

    x = jax.random.normal(kx, (B, tuple_len, feature_size), dtype=jnp.float32)

    # Deterministic parameter init (uniform, a la torch.nn.Linear default).
    def linear_init(kw, kb, fan_in, fan_out):
        bound = 1.0 / math.sqrt(fan_in)
        w = jax.random.uniform(kw, (fan_in, fan_out), jnp.float32, -bound, bound)
        b = jax.random.uniform(kb, (fan_out,), jnp.float32, -bound, bound)
        return w, b

    w7, b7 = linear_init(k7w, k7b, feature_size * 2, HIDDEN)
    w8, b8 = linear_init(k8w, k8b, HIDDEN * pair_num, class_num)

    out = vcop_header(x, w7, b7, w8, b8, tuple_len=tuple_len, tile_b=16)  # grid of 3 batch tiles
    out = jax.block_until_ready(out)

    ref = reference(x, w7, b7, w8, b8, tuple_len=tuple_len)
    assert out.shape == (B, class_num)
    assert jnp.allclose(out, ref, atol=1e-3, rtol=1e-3), "mismatch vs reference"

    print("KERNEL_OK")
</pallas_src>

<mosaic_0001>
module attributes {stable_mosaic.version = 11 : i64} {
  func.func @kernel(%arg0: i32, %arg1: memref<3x16x128xf32, #tpu.memory_space<vmem>>, %arg2: memref<128x512xf32, #tpu.memory_space<vmem>>, %arg3: memref<128x512xf32, #tpu.memory_space<vmem>>, %arg4: memref<1x512xf32, #tpu.memory_space<vmem>>, %arg5: memref<3x512x128xf32, #tpu.memory_space<vmem>>, %arg6: memref<1x128xf32, #tpu.memory_space<vmem>>, %arg7: memref<16x128xf32, #tpu.memory_space<vmem>>) attributes {dimension_semantics = [#tpu.dimension_semantics<parallel>], iteration_bounds = array<i64: 3>, scalar_prefetch = 0 : i64, scratch_operands = 0 : i64, tpu.core_type = #tpu.core_type<tc>, window_params = [{transform_indices = @transform_0, window_bounds = array<i64: 3, 16, 128>}, {pipeline_mode = #tpu.pipeline_mode<synchronous>, transform_indices = @transform_1, window_bounds = array<i64: 128, 512>}, {pipeline_mode = #tpu.pipeline_mode<synchronous>, transform_indices = @transform_2, window_bounds = array<i64: 128, 512>}, {pipeline_mode = #tpu.pipeline_mode<synchronous>, transform_indices = @transform_3, window_bounds = array<i64: 1, 512>}, {pipeline_mode = #tpu.pipeline_mode<synchronous>, transform_indices = @transform_4, window_bounds = array<i64: 3, 512, 128>}, {pipeline_mode = #tpu.pipeline_mode<synchronous>, transform_indices = @transform_5, window_bounds = array<i64: 1, 128>}, {transform_indices = @transform_6, window_bounds = array<i64: 16, 128>}]} {
    %c0 = arith.constant 0 : index
    %c0_0 = arith.constant 0 : index
    %c0_1 = arith.constant 0 : index
    %0 = vector.load %arg1[%c0, %c0_0, %c0_1] : memref<3x16x128xf32, #tpu.memory_space<vmem>>, vector<3x16x128xf32>
    %1 = vector.shape_cast %0 : vector<3x16x128xf32> to vector<48x128xf32>
    %c0_2 = arith.constant 0 : index
    %c0_3 = arith.constant 0 : index
    %2 = vector.load %arg2[%c0_2, %c0_3] : memref<128x512xf32, #tpu.memory_space<vmem>>, vector<128x512xf32>
    %cst = arith.constant dense<0.000000e+00> : vector<48x512xf32>
    %3 = tpu.matmul %1, %2, %cst {dimension_numbers = #tpu.dot_dimension_numbers<[1], [0], [0], [1], [0, 0, 1, 1], [], []>} : vector<48x128xf32>, vector<128x512xf32>, vector<48x512xf32> -> vector<48x512xf32>
    %c0_4 = arith.constant 0 : index
    %c0_5 = arith.constant 0 : index
    %4 = vector.load %arg4[%c0_4, %c0_5] : memref<1x512xf32, #tpu.memory_space<vmem>>, vector<1x512xf32>
    %5 = vector.broadcast %4 : vector<1x512xf32> to vector<48x512xf32>
    %6 = arith.addf %3, %5 : vector<48x512xf32>
    %c0_6 = arith.constant 0 : index
    %c0_7 = arith.constant 0 : index
    %7 = vector.load %arg3[%c0_6, %c0_7] : memref<128x512xf32, #tpu.memory_space<vmem>>, vector<128x512xf32>
    %cst_8 = arith.constant dense<0.000000e+00> : vector<48x512xf32>
    %8 = tpu.matmul %1, %7, %cst_8 {dimension_numbers = #tpu.dot_dimension_numbers<[1], [0], [0], [1], [0, 0, 1, 1], [], []>} : vector<48x128xf32>, vector<128x512xf32>, vector<48x512xf32> -> vector<48x512xf32>
    %9 = vector.extract_strided_slice %6 {offsets = [0, 0], sizes = [16, 512], strides = [1, 1]} : vector<48x512xf32> to vector<16x512xf32>
    %10 = vector.extract_strided_slice %8 {offsets = [16, 0], sizes = [16, 512], strides = [1, 1]} : vector<48x512xf32> to vector<16x512xf32>
    %11 = arith.addf %9, %10 : vector<16x512xf32>
    %cst_9 = arith.constant 0.000000e+00 : f32
    %12 = vector.broadcast %cst_9 : f32 to vector<16x512xf32>
    %13 = arith.maximumf %11, %12 : vector<16x512xf32>
    %c0_10 = arith.constant 0 : index
    %c0_11 = arith.constant 0 : index
    %c0_12 = arith.constant 0 : index
    %14 = vector.load %arg5[%c0_10, %c0_11, %c0_12] : memref<3x512x128xf32, #tpu.memory_space<vmem>>, vector<1x512x128xf32>
    %15 = vector.shape_cast %14 : vector<1x512x128xf32> to vector<512x128xf32>
    %cst_13 = arith.constant dense<0.000000e+00> : vector<16x128xf32>
    %16 = tpu.matmul %13, %15, %cst_13 {dimension_numbers = #tpu.dot_dimension_numbers<[1], [0], [0], [1], [0, 0, 1, 1], [], []>} : vector<16x512xf32>, vector<512x128xf32>, vector<16x128xf32> -> vector<16x128xf32>
    %17 = vector.extract_strided_slice %6 {offsets = [0, 0], sizes = [16, 512], strides = [1, 1]} : vector<48x512xf32> to vector<16x512xf32>
    %18 = vector.extract_strided_slice %8 {offsets = [32, 0], sizes = [16, 512], strides = [1, 1]} : vector<48x512xf32> to vector<16x512xf32>
    %19 = arith.addf %17, %18 : vector<16x512xf32>
    %cst_14 = arith.constant 0.000000e+00 : f32
    %20 = vector.broadcast %cst_14 : f32 to vector<16x512xf32>
    %21 = arith.maximumf %19, %20 : vector<16x512xf32>
    %c1 = arith.constant 1 : index
    %c0_15 = arith.constant 0 : index
    %c0_16 = arith.constant 0 : index
    %22 = vector.load %arg5[%c1, %c0_15, %c0_16] : memref<3x512x128xf32, #tpu.memory_space<vmem>>, vector<1x512x128xf32>
    %23 = vector.shape_cast %22 : vector<1x512x128xf32> to vector<512x128xf32>
    %cst_17 = arith.constant dense<0.000000e+00> : vector<16x128xf32>
    %24 = tpu.matmul %21, %23, %cst_17 {dimension_numbers = #tpu.dot_dimension_numbers<[1], [0], [0], [1], [0, 0, 1, 1], [], []>} : vector<16x512xf32>, vector<512x128xf32>, vector<16x128xf32> -> vector<16x128xf32>
    %25 = arith.addf %16, %24 : vector<16x128xf32>
    %26 = vector.extract_strided_slice %6 {offsets = [16, 0], sizes = [16, 512], strides = [1, 1]} : vector<48x512xf32> to vector<16x512xf32>
    %27 = vector.extract_strided_slice %8 {offsets = [32, 0], sizes = [16, 512], strides = [1, 1]} : vector<48x512xf32> to vector<16x512xf32>
    %28 = arith.addf %26, %27 : vector<16x512xf32>
    %cst_18 = arith.constant 0.000000e+00 : f32
    %29 = vector.broadcast %cst_18 : f32 to vector<16x512xf32>
    %30 = arith.maximumf %28, %29 : vector<16x512xf32>
    %c2 = arith.constant 2 : index
    %c0_19 = arith.constant 0 : index
    %c0_20 = arith.constant 0 : index
    %31 = vector.load %arg5[%c2, %c0_19, %c0_20] : memref<3x512x128xf32, #tpu.memory_space<vmem>>, vector<1x512x128xf32>
    %32 = vector.shape_cast %31 : vector<1x512x128xf32> to vector<512x128xf32>
    %cst_21 = arith.constant dense<0.000000e+00> : vector<16x128xf32>
    %33 = tpu.matmul %30, %32, %cst_21 {dimension_numbers = #tpu.dot_dimension_numbers<[1], [0], [0], [1], [0, 0, 1, 1], [], []>} : vector<16x512xf32>, vector<512x128xf32>, vector<16x128xf32> -> vector<16x128xf32>
    %34 = arith.addf %25, %33 : vector<16x128xf32>
    %c0_22 = arith.constant 0 : index
    %c0_23 = arith.constant 0 : index
    %35 = vector.load %arg6[%c0_22, %c0_23] : memref<1x128xf32, #tpu.memory_space<vmem>>, vector<1x128xf32>
    %36 = vector.broadcast %35 : vector<1x128xf32> to vector<16x128xf32>
    %37 = arith.addf %34, %36 : vector<16x128xf32>
    %c0_24 = arith.constant 0 : index
    %c0_25 = arith.constant 0 : index
    %38 = vector.load %arg7[%c0_24, %c0_25] : memref<16x128xf32, #tpu.memory_space<vmem>>, vector<16x128xf32>
    tpu.vector_store %arg7[%c0_24, %c0_25], %37 {strides = array<i32>} : memref<16x128xf32, #tpu.memory_space<vmem>>, vector<16x128xf32>,
    return
  }
  func.func @transform_0(%arg0: i32) -> (i32, i32, i32) {
    %c0_i32 = arith.constant 0 : i32
    %c0_i32_0 = arith.constant 0 : i32
    %c0_i32_1 = arith.constant 0 : i32
    return %c0_i32, %arg0, %c0_i32_0 : i32, i32, i32
  }
  func.func @transform_1(%arg0: i32) -> (i32, i32) {
    %c0_i32 = arith.constant 0 : i32
    %c0_i32_0 = arith.constant 0 : i32
    %c0_i32_1 = arith.constant 0 : i32
    return %c0_i32, %c0_i32_0 : i32, i32
  }
  func.func @transform_2(%arg0: i32) -> (i32, i32) {
    %c0_i32 = arith.constant 0 : i32
    %c0_i32_0 = arith.constant 0 : i32
    %c0_i32_1 = arith.constant 0 : i32
    return %c0_i32, %c0_i32_0 : i32, i32
  }
  func.func @transform_3(%arg0: i32) -> (i32, i32) {
    %c0_i32 = arith.constant 0 : i32
    %c0_i32_0 = arith.constant 0 : i32
    %c0_i32_1 = arith.constant 0 : i32
    return %c0_i32, %c0_i32_0 : i32, i32
  }
  func.func @transform_4(%arg0: i32) -> (i32, i32, i32) {
    %c0_i32 = arith.constant 0 : i32
    %c0_i32_0 = arith.constant 0 : i32
    %c0_i32_1 = arith.constant 0 : i32
    %c0_i32_2 = arith.constant 0 : i32
    return %c0_i32, %c0_i32_0, %c0_i32_1 : i32, i32, i32
  }
  func.func @transform_5(%arg0: i32) -> (i32, i32) {
    %c0_i32 = arith.constant 0 : i32
    %c0_i32_0 = arith.constant 0 : i32
    %c0_i32_1 = arith.constant 0 : i32
    return %c0_i32, %c0_i32_0 : i32, i32
  }
  func.func @transform_6(%arg0: i32) -> (i32, i32) {
    %c0_i32 = arith.constant 0 : i32
    %c0_i32_0 = arith.constant 0 : i32
    return %arg0, %c0_i32 : i32, i32
  }
}

</mosaic_0001>

<llo_original>
// kernel: vcop_header.1
$region0: #{vcop_header.1}
  #allocation0 [shape = 'u32[]', space=smem, size = 0x4, offset = 0x4, fixed_abs, tag = 'smem constant byte address 0x4 - core index']
  #allocation1 [shape = 'u32[144,128]{1,0:T(1,128)}', space=vmem, size = 0x12000, scoped, tag = 'internal scratch']
  %s0 = inlined_call_operand.vmem [shape: f32[3,48,128], index: 0, kind: input, shape index: {}]
  %s1 = inlined_call_operand.vmem [shape: f32[128,512], index: 1, kind: input, shape index: {}]
  %s2 = inlined_call_operand.vmem [shape: f32[128,512], index: 2, kind: input, shape index: {}]
  %s3 = inlined_call_operand.vmem [shape: f32[1,512], index: 3, kind: input, shape index: {}]
  %s4 = inlined_call_operand.vmem [shape: f32[3,512,128], index: 4, kind: input, shape index: {}]
  %s5 = inlined_call_operand.vmem [shape: f32[1,128], index: 5, kind: input, shape index: {}]
  %s6 = inlined_call_operand.vmem [shape: f32[48,128], index: 6, kind: output, shape index: {}]
  %s7 = sld [smem:[#allocation0]]
  $region95: #{vcop_header.1} parent=0
    _
  %s9 = ssub.s32 1, %s7
  %s10 = scalar_select 0, %s9, %s7
  $region1: #{vcop_header.1} parent=0
    #allocation2 [shape = 'u8[49152]{0}', space=vmem, size = 0xc000, scoped, tag = 'input window, operand 0']
    loop: start=0, step=1, limit=5
    $region2: #{vcop_header.1} parent=1 // loop_pre_header
      _
    $region3: #{vcop_header.1} parent=1 // loop_header
      %s12 = sphi 0, %s16
      %p13 = scmp.ge.s32.totalorder %s12, 5
      %s22 = sphi 0, %s24
      %s25 = sphi 0, %s22
      %s26 = sphi 0, %s25
      %s42 = sphi 0, %s26
      %s46 = sphi 0, %s46
      %s48 = sphi 0, %s46
      %s49 = sphi 0, %s48
      %s63 = sphi 0, %s49
      %s67 = sphi 0, %s67
      %s69 = sphi 0, %s67
      %s70 = sphi 0, %s69
      %s84 = sphi 0, %s70
      %s88 = sphi 0, %s88
      %s90 = sphi 0, %s88
      %s91 = sphi 0, %s90
      %s105 = sphi 0, %s91
      %s109 = sphi 0, %s109
      %s111 = sphi 0, %s109
      %s112 = sphi 0, %s111
      %s126 = sphi 0, %s112
      %s130 = sphi 0, %s130
      %s132 = sphi 0, %s130
      %s133 = sphi 0, %s132
      %s147 = sphi 0, %s133
      %s153 = sphi 0, %s155
      %s156 = sphi 0, %s153
      %s157 = sphi 0, %s156
      %s173 = sphi 0, %s157
    $region4: #{vcop_header.1} parent=1 // loop_header_branch
      %15 = sbr.rel (%p13) target = $region8
    $region5: #{vcop_header.1} parent=1 // loop_body
      %s17 = ssub.s32 %s12, 1
      %s18 = ssub.s32 %s12, 2
      %s19 = sadd.s32 %s12, 1
      %s20 = ssub.s32 %s12, %s19
      %p21 = scmp.eq.s32.totalorder %s20, 0
      %s23 = sadd.s32 %s22, 1
      %s24 = scalar_select %p21, %s22, %s23
      %p27 = pneg %p21
      %p28 = scmp.eq.s32.totalorder %s12, 2
      %p29 = por %p27, %p28
      %p30 = scmp.ne.s32.totalorder %s22, %s25
      %p31 = scmp.eq.s32.totalorder %s12, 0
      %p32 = por %p30, %p31
      %p33 = scmp.ne.s32.totalorder %s22, %s25
      %p34 = scmp.eq.s32.totalorder %s17, 2
      %p35 = por %p33, %p34
      %p36 = scmp.ne.s32.totalorder %s25, %s26
      %p37 = scmp.eq.s32.totalorder %s17, 0
      %p38 = por %p36, %p37
      %p39 = scmp.ne.s32.totalorder %s25, %s26
      %p40 = scmp.eq.s32.totalorder %s18, 2
      %p41 = por %p39, %p40
      %p43 = scmp.ne.s32.totalorder %s26, %s42
      %p44 = scmp.eq.s32.totalorder %s18, 0
      %p45 = por %p43, %p44
      %s47 = sadd.s32 %s46, 1
      %p50 = scmp.eq.s32.totalorder %s12, 2
      %p51 = scmp.ne.s32.totalorder %s46, %s48
      %p52 = scmp.eq.s32.totalorder %s12, 0
      %p53 = por %p51, %p52
      %p54 = scmp.ne.s32.totalorder %s46, %s48
      %p55 = scmp.eq.s32.totalorder %s17, 2
      %p56 = por %p54, %p55
      %p57 = scmp.ne.s32.totalorder %s48, %s49
      %p58 = scmp.eq.s32.totalorder %s17, 0
      %p59 = por %p57, %p58
      %p60 = scmp.ne.s32.totalorder %s48, %s49
      %p61 = scmp.eq.s32.totalorder %s18, 2
      %p62 = por %p60, %p61
      %p64 = scmp.ne.s32.totalorder %s49, %s63
      %p65 = scmp.eq.s32.totalorder %s18, 0
      %p66 = por %p64, %p65
      %s68 = sadd.s32 %s67, 1
      %p71 = scmp.eq.s32.totalorder %s12, 2
      %p72 = scmp.ne.s32.totalorder %s67, %s69
      %p73 = scmp.eq.s32.totalorder %s12, 0
      %p74 = por %p72, %p73
      %p75 = scmp.ne.s32.totalorder %s67, %s69
      %p76 = scmp.eq.s32.totalorder %s17, 2
      %p77 = por %p75, %p76
      %p78 = scmp.ne.s32.totalorder %s69, %s70
      %p79 = scmp.eq.s32.totalorder %s17, 0
      %p80 = por %p78, %p79
      %p81 = scmp.ne.s32.totalorder %s69, %s70
      %p82 = scmp.eq.s32.totalorder %s18, 2
      %p83 = por %p81, %p82
      %p85 = scmp.ne.s32.totalorder %s70, %s84
      %p86 = scmp.eq.s32.totalorder %s18, 0
      %p87 = por %p85, %p86
      %s89 = sadd.s32 %s88, 1
      %p92 = scmp.eq.s32.totalorder %s12, 2
      %p93 = scmp.ne.s32.totalorder %s88, %s90
      %p94 = scmp.eq.s32.totalorder %s12, 0
      %p95 = por %p93, %p94
      %p96 = scmp.ne.s32.totalorder %s88, %s90
      %p97 = scmp.eq.s32.totalorder %s17, 2
      %p98 = por %p96, %p97
      %p99 = scmp.ne.s32.totalorder %s90, %s91
      %p100 = scmp.eq.s32.totalorder %s17, 0
      %p101 = por %p99, %p100
      %p102 = scmp.ne.s32.totalorder %s90, %s91
      %p103 = scmp.eq.s32.totalorder %s18, 2
      %p104 = por %p102, %p103
      %p106 = scmp.ne.s32.totalorder %s91, %s105
      %p107 = scmp.eq.s32.totalorder %s18, 0
      %p108 = por %p106, %p107
      %s110 = sadd.s32 %s109, 1
      %p113 = scmp.eq.s32.totalorder %s12, 2
      %p114 = scmp.ne.s32.totalorder %s109, %s111
      %p115 = scmp.eq.s32.totalorder %s12, 0
      %p116 = por %p114, %p115
      %p117 = scmp.ne.s32.totalorder %s109, %s111
      %p118 = scmp.eq.s32.totalorder %s17, 2
      %p119 = por %p117, %p118
      %p120 = scmp.ne.s32.totalorder %s111, %s112
      %p121 = scmp.eq.s32.totalorder %s17, 0
      %p122 = por %p120, %p121
      %p123 = scmp.ne.s32.totalorder %s111, %s112
      %p124 = scmp.eq.s32.totalorder %s18, 2
      %p125 = por %p123, %p124
      %p127 = scmp.ne.s32.totalorder %s112, %s126
      %p128 = scmp.eq.s32.totalorder %s18, 0
      %p129 = por %p127, %p128
      %s131 = sadd.s32 %s130, 1
      %p134 = scmp.eq.s32.totalorder %s12, 2
      %p135 = scmp.ne.s32.totalorder %s130, %s132
      %p136 = scmp.eq.s32.totalorder %s12, 0
      %p137 = por %p135, %p136
      %p138 = scmp.ne.s32.totalorder %s130, %s132
      %p139 = scmp.eq.s32.totalorder %s17, 2
      %p140 = por %p138, %p139
      %p141 = scmp.ne.s32.totalorder %s132, %s133
      %p142 = scmp.eq.s32.totalorder %s17, 0
      %p143 = por %p141, %p142
      %p144 = scmp.ne.s32.totalorder %s132, %s133
      %p145 = scmp.eq.s32.totalorder %s18, 2
      %p146 = por %p144, %p145
      %p148 = scmp.ne.s32.totalorder %s133, %s147
      %p149 = scmp.eq.s32.totalorder %s18, 0
      %p150 = por %p148, %p149
      %s151 = ssub.s32 %s12, %s19
      %p152 = scmp.eq.s32.totalorder %s151, 0
      %s154 = sadd.s32 %s153, 1
      %s155 = scalar_select %p152, %s153, %s154
      %p158 = pneg %p152
      %p159 = scmp.eq.s32.totalorder %s12, 2
      %p160 = por %p158, %p159
      %p161 = scmp.ne.s32.totalorder %s153, %s156
      %p162 = scmp.eq.s32.totalorder %s12, 0
      %p163 = por %p161, %p162
      %p164 = scmp.ne.s32.totalorder %s153, %s156
      %p165 = scmp.eq.s32.totalorder %s17, 2
      %p166 = por %p164, %p165
      %p167 = scmp.ne.s32.totalorder %s156, %s157
      %p168 = scmp.eq.s32.totalorder %s17, 0
      %p169 = por %p167, %p168
      %p170 = scmp.ne.s32.totalorder %s156, %s157
      %p171 = scmp.eq.s32.totalorder %s18, 2
      %p172 = por %p170, %p171
      %p174 = scmp.ne.s32.totalorder %s157, %s173
      %p175 = scmp.eq.s32.totalorder %s18, 0
      %p176 = por %p174, %p175
      %p177 = scmp.le.s32.totalorder 1, %s12
      %p178 = scmp.lt.s32.totalorder %s12, 4
      %p179 = pnand %p177, %p178
      %p180 = pneg %p179
      // Predicated region
      $region9: #{vcop_header.1} parent=5 // pred_check
        _
      $region10: #{vcop_header.1} parent=5 // pred_check_branch
        %182 = sbr.rel (%p179) target = $region12
      $region11: #{vcop_header.1} parent=5 // pred_region
        %s183 = ssub.s32 %s12, 1
        // Predicated region
        $region13: #{vcop_header.1} parent=11 // pred_check
          %p184 = pneg %p59
        $region14: #{vcop_header.1} parent=11 // pred_check_branch
          %186 = sbr.rel (%p184) target = $region16
        $region15: #{vcop_header.1} parent=11 // pred_region
          _
        $region16: #{vcop_header.1} parent=11 // pred_fallthru
          _
        // Predicated region
        $region17: #{vcop_header.1} parent=11 // pred_check
          %p187 = pneg %p80
        $region18: #{vcop_header.1} parent=11 // pred_check_branch
          %189 = sbr.rel (%p187) target = $region20
        $region19: #{vcop_header.1} parent=11 // pred_region
          _
        $region20: #{vcop_header.1} parent=11 // pred_fallthru
          _
        // Predicated region
        $region21: #{vcop_header.1} parent=11 // pred_check
          %p190 = pneg %p101
        $region22: #{vcop_header.1} parent=11 // pred_check_branch
          %192 = sbr.rel (%p190) target = $region24
        $region23: #{vcop_header.1} parent=11 // pred_region
          _
        $region24: #{vcop_header.1} parent=11 // pred_fallthru
          _
        // Predicated region
        $region25: #{vcop_header.1} parent=11 // pred_check
          %p193 = pneg %p122
        $region26: #{vcop_header.1} parent=11 // pred_check_branch
          %195 = sbr.rel (%p193) target = $region28
        $region27: #{vcop_header.1} parent=11 // pred_region
          _
        $region28: #{vcop_header.1} parent=11 // pred_fallthru
          _
        // Predicated region
        $region29: #{vcop_header.1} parent=11 // pred_check
          %p196 = pneg %p143
        $region30: #{vcop_header.1} parent=11 // pred_check_branch
          %198 = sbr.rel (%p196) target = $region32
        $region31: #{vcop_header.1} parent=11 // pred_region
          _
        $region32: #{vcop_header.1} parent=11 // pred_fallthru
          _
      $region12: #{vcop_header.1} parent=5 // pred_fallthru
        _
      %p199 = scmp.lt.s32.totalorder %s12, 3
      // Predicated region
      $region33: #{vcop_header.1} parent=5 // pred_check
        %p200 = pneg %p199
      $region34: #{vcop_header.1} parent=5 // pred_check_branch
        %202 = sbr.rel (%p200) target = $region36
      $region35: #{vcop_header.1} parent=5 // pred_region
        // Predicated region
        $region37: #{vcop_header.1} parent=35 // pred_check
          %p203 = pneg %p32
        $region38: #{vcop_header.1} parent=35 // pred_check_branch
          %205 = sbr.rel (%p203) target = $region40
        $region39: #{vcop_header.1} parent=35 // pred_region
          %s206 = sand.u32 %s22, 1
          %s207 = sand.u32 %s22, 1
          %s208 = smul.addr %s207, 48
          %s209 = scalar_lea.vmem [#allocation2], %s208
          %s210 = smul.u32 2, %s12
          %s211 = smul.addr %s210, 8
          %s212 = scalar_lea.vmem %s0, %s211
          // Predicated region
          $region41: #{vcop_header.1} parent=39 // pred_check
            _
          $region42: #{vcop_header.1} parent=39 // pred_check_branch
            %214 = sbr.rel (0) target = $region44
          $region43: #{vcop_header.1} parent=39 // pred_region
            // Predicated region
            $region45: #{vcop_header.1} parent=43 // pred_check
              _
            $region46: #{vcop_header.1} parent=43 // pred_check_branch
              %216 = sbr.rel (0) target = $region48
            $region47: #{vcop_header.1} parent=43 // pred_region
              // Predicated region
              $region60: #{vcop_header.1} parent=47 // pred_check
                _
              $region61: #{vcop_header.1} parent=47 // pred_check_branch
                %241 = sbr.rel (0) target = $region63
              $region62: #{vcop_header.1} parent=47 // pred_region
                loop: start=0, step=1, limit=1
                $region64: #{vcop_header.1} parent=62 // loop_pre_header
                  _
                $region65: #{vcop_header.1} parent=62 // loop_header
                  %s243 = sphi 0, %s247
                  %p244 = scmp.ge.s32.totalorder %s243, 1
                  %s248 = sphi %s212, %s212
                  %s249 = sphi %s209, %s209
                $region66: #{vcop_header.1} parent=62 // loop_header_branch
                  %246 = sbr.rel (%p244) target = $region70
                $region67: #{vcop_header.1} parent=62 // loop_body
                  %v250 = vld [vmem:[%s248] sm:$0xff]
                  %251 = vst [vmem:[%s249] sm:$0xff] %v250
                  %v252 = vld [vmem:[%s248 + $0x8] sm:$0xff]
                  %253 = vst [vmem:[%s249 + $0x8] sm:$0xff] %v252
                  %v254 = vld [vmem:[%s248 + $0x30] sm:$0xff]
                  %255 = vst [vmem:[%s249 + $0x10] sm:$0xff] %v254
                  %v256 = vld [vmem:[%s248 + $0x38] sm:$0xff]
                  %257 = vst [vmem:[%s249 + $0x18] sm:$0xff] %v256
                  %v258 = vld [vmem:[%s248 + $0x60] sm:$0xff]
                  %259 = vst [vmem:[%s249 + $0x20] sm:$0xff] %v258
                  %v260 = vld [vmem:[%s248 + $0x68] sm:$0xff]
                  %261 = vst [vmem:[%s249 + $0x28] sm:$0xff] %v260
                $region68: #{vcop_header.1} parent=62 // loop_footer
                  %s247 = sadd.s32 1, %s243
                $region69: #{vcop_header.1} parent=62 // loop_footer_branch
                  %242 = sbr.rel target = $region65
                $region70: #{vcop_header.1} parent=62 // loop_exit
                  _
              $region63: #{vcop_header.1} parent=47 // pred_fallthru
                _
              // Predicated region
              $region71: #{vcop_header.1} parent=47 // pred_check
                _
              $region72: #{vcop_header.1} parent=47 // pred_check_branch
                %263 = sbr.rel target = $region74
              $region73: #{vcop_header.1} parent=47 // pred_region
                _
              $region74: #{vcop_header.1} parent=47 // pred_fallthru
                _
            $region48: #{vcop_header.1} parent=43 // pred_fallthru
              _
            // Predicated region
            $region49: #{vcop_header.1} parent=43 // pred_check
              _
            $region50: #{vcop_header.1} parent=43 // pred_check_branch
              %218 = sbr.rel target = $region52
            $region51: #{vcop_header.1} parent=43 // pred_region
              loop: start=0, step=1, limit=1
              $region53: #{vcop_header.1} parent=51 // loop_pre_header
                _
              $region54: #{vcop_header.1} parent=51 // loop_header
                %s221 = sphi 0, %s225
                %p222 = scmp.ge.s32.totalorder %s221, 1
                %s226 = sphi %s212, %s212
                %s227 = sphi %s209, %s209
              $region55: #{vcop_header.1} parent=51 // loop_header_branch
                %224 = sbr.rel (%p222) target = $region59
              $region56: #{vcop_header.1} parent=51 // loop_body
                %v228 = vld [vmem:[%s226] sm:$0xff]
                %229 = vst [vmem:[%s227] sm:$0xff] %v228
                %v230 = vld [vmem:[%s226 + $0x8] sm:$0xff]
                %231 = vst [vmem:[%s227 + $0x8] sm:$0xff] %v230
                %v232 = vld [vmem:[%s226 + $0x30] sm:$0xff]
                %233 = vst [vmem:[%s227 + $0x10] sm:$0xff] %v232
                %v234 = vld [vmem:[%s226 + $0x38] sm:$0xff]
                %235 = vst [vmem:[%s227 + $0x18] sm:$0xff] %v234
                %v236 = vld [vmem:[%s226 + $0x60] sm:$0xff]
                %237 = vst [vmem:[%s227 + $0x20] sm:$0xff] %v236
                %v238 = vld [vmem:[%s226 + $0x68] sm:$0xff]
                %239 = vst [vmem:[%s227 + $0x28] sm:$0xff] %v238
              $region57: #{vcop_header.1} parent=51 // loop_footer
                %s225 = sadd.s32 1, %s221
              $region58: #{vcop_header.1} parent=51 // loop_footer_branch
                %220 = sbr.rel target = $region54
              $region59: #{vcop_header.1} parent=51 // loop_exit
                _
            $region52: #{vcop_header.1} parent=43 // pred_fallthru
              _
          $region44: #{vcop_header.1} parent=39 // pred_fallthru
            _
          %264 = vnop
        $region40: #{vcop_header.1} parent=35 // pred_fallthru
          _
      $region36: #{vcop_header.1} parent=5 // pred_fallthru
        _
      %p265 = scmp.le.s32.totalorder 1, %s12
      %p266 = scmp.lt.s32.totalorder %s12, 4
      %p267 = pnand %p265, %p266
      %p268 = pneg %p267
      // Predicated region
      $region75: #{vcop_header.1} parent=5 // pred_check
        _
      $region76: #{vcop_header.1} parent=5 // pred_check_branch
        %270 = sbr.rel (%p267) target = $region78
      $region77: #{vcop_header.1} parent=5 // pred_region
        %s271 = ssub.s32 %s12, 1
        %s272 = sand.u32 %s25, 1
        %s273 = sand.u32 %s25, 1
        %s274 = smul.addr %s273, 48
        %s275 = scalar_lea.vmem [#allocation2], %s274
        // Predicated region
        $region79: #{vcop_header.1} parent=77 // pred_check
          %p276 = pneg %p38
        $region80: #{vcop_header.1} parent=77 // pred_check_branch
          %278 = sbr.rel (%p276) target = $region82
        $region81: #{vcop_header.1} parent=77 // pred_region
          _
        $region82: #{vcop_header.1} parent=77 // pred_fallthru
          _
        %s279 = sand.u32 %s25, 1
        %s280 = sand.u32 %s25, 1
        %s281 = smul.addr %s280, 48
        %s282 = scalar_lea.vmem [#allocation2], %s281
        %p283 = pneg %p38
        %p284 = pneg %p35
        %p285 = pneg %p59
        %p286 = pneg %p56
        %p287 = pneg %p80
        %p288 = pneg %p77
        %p289 = pneg %p101
        %p290 = pneg %p98
        %p291 = pneg %p122
        %p292 = pneg %p119
        %p293 = pneg %p143
        %p294 = pneg %p140
        %p295 = pneg %p169
        %p296 = pneg %p166
        %s297 = smul.u32 2, %s17
        %p298 = scmp.lt.s32.totalorder %s297, 5
        %s299 = scalar_select %p298, %s297, 5
        %s300 = smul.addr %s299, 8
        %s301 = scalar_lea.vmem %s6, %s300
        %s302 = smul.u32 2, %s17
        %s303 = smul.u32 2, %s17
        %p304 = scmp.lt.s32.totalorder %s303, 5
        %s305 = scalar_select %p304, %s303, 5
        %s306 = smul.addr %s305, 8
        %s307 = scalar_lea.vmem %s6, %s306
        %s308 = smul.u32 2, %s17
        %v309 = vld [vmem:[%s275] sm:$0xff]
        %v310 = vld [vmem:[%s275 + $0x8] sm:$0xff]
        %v311 = vld [vmem:[%s275 + $0x10] sm:$0xff]
        %v312 = vld [vmem:[%s275 + $0x18] sm:$0xff]
        %v313 = vld [vmem:[%s275 + $0x20] sm:$0xff]
        %v314 = vld [vmem:[%s275 + $0x28] sm:$0xff]
        %v315 = vld [vmem:[%s1] sm:$0xff]
        %v316 = vld [vmem:[%s1 + $0x8] sm:$0xff]
        %v317 = vld [vmem:[%s1 + $0x10] sm:$0xff]
        %v318 = vld [vmem:[%s1 + $0x18] sm:$0xff]
        %v319 = vld [vmem:[%s1 + $0x20] sm:$0xff]
        %v320 = vld [vmem:[%s1 + $0x28] sm:$0xff]
        %v321 = vld [vmem:[%s1 + $0x30] sm:$0xff]
        %v322 = vld [vmem:[%s1 + $0x38] sm:$0xff]
        %v323 = vld [vmem:[%s1 + $0x40] sm:$0xff]
        %v324 = vld [vmem:[%s1 + $0x48] sm:$0xff]
        %v325 = vld [vmem:[%s1 + $0x50] sm:$0xff]
        %v326 = vld [vmem:[%s1 + $0x58] sm:$0xff]
        %v327 = vld [vmem:[%s1 + $0x60] sm:$0xff]
        %v328 = vld [vmem:[%s1 + $0x68] sm:$0xff]
        %v329 = vld [vmem:[%s1 + $0x70] sm:$0xff]
        %v330 = vld [vmem:[%s1 + $0x78] sm:$0xff]
        %v331 = vld [vmem:[%s1 + $0x80] sm:$0xff]
        %v332 = vld [vmem:[%s1 + $0x88] sm:$0xff]
        %v333 = vld [vmem:[%s1 + $0x90] sm:$0xff]
        %v334 = vld [vmem:[%s1 + $0x98] sm:$0xff]
        %v335 = vld [vmem:[%s1 + $0xa0] sm:$0xff]
        %v336 = vld [vmem:[%s1 + $0xa8] sm:$0xff]
        %v337 = vld [vmem:[%s1 + $0xb0] sm:$0xff]
        %v338 = vld [vmem:[%s1 + $0xb8] sm:$0xff]
        %v339 = vld [vmem:[%s1 + $0xc0] sm:$0xff]
        %v340 = vld [vmem:[%s1 + $0xc8] sm:$0xff]
        %v341 = vld [vmem:[%s1 + $0xd0] sm:$0xff]
        %v342 = vld [vmem:[%s1 + $0xd8] sm:$0xff]
        %v343 = vld [vmem:[%s1 + $0xe0] sm:$0xff]
        %v344 = vld [vmem:[%s1 + $0xe8] sm:$0xff]
        %v345 = vld [vmem:[%s1 + $0xf0] sm:$0xff]
        %v346 = vld [vmem:[%s1 + $0xf8] sm:$0xff]
        %v347 = vld [vmem:[%s1 + $0x100] sm:$0xff]
        %v348 = vld [vmem:[%s1 + $0x108] sm:$0xff]
        %v349 = vld [vmem:[%s1 + $0x110] sm:$0xff]
        %v350 = vld [vmem:[%s1 + $0x118] sm:$0xff]
        %v351 = vld [vmem:[%s1 + $0x120] sm:$0xff]
        %v352 = vld [vmem:[%s1 + $0x128] sm:$0xff]
        %v353 = vld [vmem:[%s1 + $0x130] sm:$0xff]
        %v354 = vld [vmem:[%s1 + $0x138] sm:$0xff]
        %v355 = vld [vmem:[%s1 + $0x140] sm:$0xff]
        %v356 = vld [vmem:[%s1 + $0x148] sm:$0xff]
        %v357 = vld [vmem:[%s1 + $0x150] sm:$0xff]
        %v358 = vld [vmem:[%s1 + $0x158] sm:$0xff]
        %v359 = vld [vmem:[%s1 + $0x160] sm:$0xff]
        %v360 = vld [vmem:[%s1 + $0x168] sm:$0xff]
        %v361 = vld [vmem:[%s1 + $0x170] sm:$0xff]
        %v362 = vld [vmem:[%s1 + $0x178] sm:$0xff]
        %v363 = vld [vmem:[%s1 + $0x180] sm:$0xff]
        %v364 = vld [vmem:[%s1 + $0x188] sm:$0xff]
        %v365 = vld [vmem:[%s1 + $0x190] sm:$0xff]
        %v366 = vld [vmem:[%s1 + $0x198] sm:$0xff]
        %v367 = vld [vmem:[%s1 + $0x1a0] sm:$0xff]
        %v368 = vld [vmem:[%s1 + $0x1a8] sm:$0xff]
        %v369 = vld [vmem:[%s1 + $0x1b0] sm:$0xff]
        %v370 = vld [vmem:[%s1 + $0x1b8] sm:$0xff]
        %v371 = vld [vmem:[%s1 + $0x1c0] sm:$0xff]
        %v372 = vld [vmem:[%s1 + $0x1c8] sm:$0xff]
        %v373 = vld [vmem:[%s1 + $0x1d0] sm:$0xff]
        %v374 = vld [vmem:[%s1 + $0x1d8] sm:$0xff]
        %v375 = vld [vmem:[%s1 + $0x1e0] sm:$0xff]
        %v376 = vld [vmem:[%s1 + $0x1e8] sm:$0xff]
        %v377 = vld [vmem:[%s1 + $0x1f0] sm:$0xff]
        %v378 = vld [vmem:[%s1 + $0x1f8] sm:$0xff]
        %v379 = vld [vmem:[%s3] sm:$0xf]
        %v381 = vlaneseq
        %v382 = vshrl.u32 %v381, 7
        %v383 = vsub.s32 0, %v382
        %v384 = vrot.slane %v379, %v383
        %v385 = vlaneseq
        %v386 = vshrl.u32 %v385, 7
        %v387 = vsub.s32 1, %v386
        %v388 = vrot.slane %v379, %v387
        %v389 = vlaneseq
        %v390 = vshrl.u32 %v389, 7
        %v391 = vsub.s32 2, %v390
        %v392 = vrot.slane %v379, %v391
        %v393 = vlaneseq
        %v394 = vshrl.u32 %v393, 7
        %v395 = vsub.s32 3, %v394
        %v396 = vrot.slane %v379, %v395
        %401 = vmatprep.subr.mxu0 %v316
        %402 = vmatpush1.msra.mxu0 %v315
        %403 = vmatprep.subr.mxu0 %v320
        %404 = vmatpush1.msra.mxu0 %v319
        %405 = vmatprep.subr.mxu0 %v324
        %406 = vmatpush1.msra.mxu0 %v323
        %407 = vmatprep.subr.mxu0 %v328
        %408 = vmatpush1.msra.mxu0 %v327
        %409 = vmatprep.subr.mxu0 %v332
        %410 = vmatpush1.msra.mxu0 %v331
        %411 = vmatprep.subr.mxu0 %v336
        %412 = vmatpush1.msra.mxu0 %v335
        %413 = vmatprep.subr.mxu0 %v340
        %414 = vmatpush1.msra.mxu0 %v339
        %415 = vmatprep.subr.mxu0 %v344
        %416 = vmatpush1.msra.mxu0 %v343
        %417 = vmatprep.subr.mxu0 %v348
        %418 = vmatpush1.msra.mxu0 %v347
        %419 = vmatprep.subr.mxu0 %v352
        %420 = vmatpush1.msra.mxu0 %v351
        %421 = vmatprep.subr.mxu0 %v356
        %422 = vmatpush1.msra.mxu0 %v355
        %423 = vmatprep.subr.mxu0 %v360
        %424 = vmatpush1.msra.mxu0 %v359
        %425 = vmatprep.subr.mxu0 %v364
        %426 = vmatpush1.msra.mxu0 %v363
        %427 = vmatprep.subr.mxu0 %v368
        %428 = vmatpush1.msra.mxu0 %v367
        %429 = vmatprep.subr.mxu0 %v372
        %430 = vmatpush1.msra.mxu0 %v371
        %431 = vmatprep.subr.mxu0 %v376
        %432 = vmatpush1.msra.mxu0 %v375
        %433 = vmatprep.subr.mxu0 0.0
        %434 = vmatpush1.msra.mxu0 0.0
        %435 = vmatprep.subr.mxu0 0.0
        %436 = vmatpush1.msra.mxu0 0.0
        %437 = vmatprep.subr.mxu0 0.0
        %438 = vmatpush1.msra.mxu0 0.0
        %439 = vmatprep.subr.mxu0 0.0
        %440 = vmatpush1.msra.mxu0 0.0
        %441 = vmatprep.subr.mxu0 0.0
        %442 = vmatpush1.msra.mxu0 0.0
        %443 = vmatprep.subr.mxu0 0.0
        %444 = vmatpush1.msra.mxu0 0.0
        %445 = vmatprep.subr.mxu0 0.0
        %446 = vmatpush1.msra.mxu0 0.0
        %447 = vmatprep.subr.mxu0 0.0
        %448 = vmatpush1.msra.mxu0 0.0
        %449 = vmatprep.subr.mxu0 0.0
        %450 = vmatpush1.msra.mxu0 0.0
        %451 = vmatprep.subr.mxu0 0.0
        %452 = vmatpush1.msra.mxu0 0.0
        %453 = vmatprep.subr.mxu0 0.0
        %454 = vmatpush1.msra.mxu0 0.0
        %455 = vmatprep.subr.mxu0 0.0
        %456 = vmatpush1.msra.mxu0 0.0
        %457 = vmatprep.subr.mxu0 0.0
        %458 = vmatpush1.msra.mxu0 0.0
        %459 = vmatprep.subr.mxu0 0.0
        %460 = vmatpush1.msra.mxu0 0.0
        %461 = vmatprep.subr.mxu0 0.0
        %462 = vmatpush1.msra.mxu0 0.0
        %463 = vmatprep.subr.mxu0 0.0
        %464 = vmatpush1.msra.mxu0 0.0
        %465 = vmatprep.mubr.f32.mxu0 0.0
        %466 = vmatmul.mubr.f32.gmra.mrb[0].mxu0 %v309
        %v467 = vpop.f32.mrb[0].mxu0
        %v468 = vadd.f32 %v384, %v467
        %v469 = vpop.f32.mrb[0].mxu0
        %v470 = vadd.f32 %v388, %v469
        %471 = vmatprep.mubr.f32.mxu0 0.0
        %472 = vmatmul.mubr.f32.gmra.mrb[0].mxu0 %v310
        %v473 = vpop.f32.mrb[0].mxu0
        %v474 = vadd.f32 %v384, %v473
        %v475 = vpop.f32.mrb[0].mxu0
        %v476 = vadd.f32 %v388, %v475
        %477 = vmatprep.mubr.f32.mxu0 0.0
        %478 = vmatmul.mubr.f32.gmra.mrb[0].mxu0 %v311
        %v479 = vpop.f32.mrb[0].mxu0
        %v480 = vadd.f32 %v384, %v479
        %v481 = vpop.f32.mrb[0].mxu0
        %v482 = vadd.f32 %v388, %v481
        %483 = vmatprep.mubr.f32.mxu0 0.0
        %484 = vmatmul.mubr.f32.gmra.mrb[0].mxu0 %v312
        %v485 = vpop.f32.mrb[0].mxu0
        %v486 = vadd.f32 %v384, %v485
        %v487 = vpop.f32.mrb[0].mxu0
        %v488 = vadd.f32 %v388, %v487
        %489 = vmatprep.mubr.f32.mxu0 0.0
        %490 = vmatmul.mubr.f32.gmra.mrb[0].mxu0 %v313
        %v491 = vpop.f32.mrb[0].mxu0
        %v492 = vpop.f32.mrb[0].mxu0
        %493 = vmatprep.mubr.f32.mxu0 0.0
        %494 = vmatmul.mubr.f32.gmra.mrb[0].mxu0 %v314
        %v495 = vpop.f32.mrb[0].mxu0
        %v496 = vpop.f32.mrb[0].mxu0
        %497 = vdwg.mxu0
        %498 = vmatprep.subr.mxu0 %v318
        %499 = vmatpush1.msra.mxu0 %v317
        %500 = vmatprep.subr.mxu0 %v322
        %501 = vmatpush1.msra.mxu0 %v321
        %502 = vmatprep.subr.mxu0 %v326
        %503 = vmatpush1.msra.mxu0 %v325
        %504 = vmatprep.subr.mxu0 %v330
        %505 = vmatpush1.msra.mxu0 %v329
        %506 = vmatprep.subr.mxu0 %v334
        %507 = vmatpush1.msra.mxu0 %v333
        %508 = vmatprep.subr.mxu0 %v338
        %509 = vmatpush1.msra.mxu0 %v337
        %510 = vmatprep.subr.mxu0 %v342
        %511 = vmatpush1.msra.mxu0 %v341
        %512 = vmatprep.subr.mxu0 %v346
        %513 = vmatpush1.msra.mxu0 %v345
        %514 = vmatprep.subr.mxu0 %v350
        %515 = vmatpush1.msra.mxu0 %v349
        %516 = vmatprep.subr.mxu0 %v354
        %517 = vmatpush1.msra.mxu0 %v353
        %518 = vmatprep.subr.mxu0 %v358
        %519 = vmatpush1.msra.mxu0 %v357
        %520 = vmatprep.subr.mxu0 %v362
        %521 = vmatpush1.msra.mxu0 %v361
        %522 = vmatprep.subr.mxu0 %v366
        %523 = vmatpush1.msra.mxu0 %v365
        %524 = vmatprep.subr.mxu0 %v370
        %525 = vmatpush1.msra.mxu0 %v369
        %526 = vmatprep.subr.mxu0 %v374
        %527 = vmatpush1.msra.mxu0 %v373
        %528 = vmatprep.subr.mxu0 %v378
        %529 = vmatpush1.msra.mxu0 %v377
        %530 = vmatprep.subr.mxu0 0.0
        %531 = vmatpush1.msra.mxu0 0.0
        %532 = vmatprep.subr.mxu0 0.0
        %533 = vmatpush1.msra.mxu0 0.0
        %534 = vmatprep.subr.mxu0 0.0
        %535 = vmatpush1.msra.mxu0 0.0
        %536 = vmatprep.subr.mxu0 0.0
        %537 = vmatpush1.msra.mxu0 0.0
        %538 = vmatprep.subr.mxu0 0.0
        %539 = vmatpush1.msra.mxu0 0.0
        %540 = vmatprep.subr.mxu0 0.0
        %541 = vmatpush1.msra.mxu0 0.0
        %542 = vmatprep.subr.mxu0 0.0
        %543 = vmatpush1.msra.mxu0 0.0
        %544 = vmatprep.subr.mxu0 0.0
        %545 = vmatpush1.msra.mxu0 0.0
        %546 = vmatprep.subr.mxu0 0.0
        %547 = vmatpush1.msra.mxu0 0.0
        %548 = vmatprep.subr.mxu0 0.0
        %549 = vmatpush1.msra.mxu0 0.0
        %550 = vmatprep.subr.mxu0 0.0
        %551 = vmatpush1.msra.mxu0 0.0
        %552 = vmatprep.subr.mxu0 0.0
        %553 = vmatpush1.msra.mxu0 0.0
        %554 = vmatprep.subr.mxu0 0.0
        %555 = vmatpush1.msra.mxu0 0.0
        %556 = vmatprep.subr.mxu0 0.0
        %557 = vmatpush1.msra.mxu0 0.0
        %558 = vmatprep.subr.mxu0 0.0
        %559 = vmatpush1.msra.mxu0 0.0
        %560 = vmatprep.subr.mxu0 0.0
        %561 = vmatpush1.msra.mxu0 0.0
        %562 = vmatprep.mubr.f32.mxu0 0.0
        %563 = vmatmul.mubr.f32.gmra.mrb[0].mxu0 %v309
        %v564 = vpop.f32.mrb[0].mxu0
        %v565 = vadd.f32 %v392, %v564
        %v566 = vpop.f32.mrb[0].mxu0
        %v567 = vadd.f32 %v396, %v566
        %568 = vmatprep.mubr.f32.mxu0 0.0
        %569 = vmatmul.mubr.f32.gmra.mrb[0].mxu0 %v310
        %v570 = vpop.f32.mrb[0].mxu0
        %v571 = vadd.f32 %v392, %v570
        %v572 = vpop.f32.mrb[0].mxu0
        %v573 = vadd.f32 %v396, %v572
        %574 = vmatprep.mubr.f32.mxu0 0.0
        %575 = vmatmul.mubr.f32.gmra.mrb[0].mxu0 %v311
        %v576 = vpop.f32.mrb[0].mxu0
        %v577 = vadd.f32 %v392, %v576
        %v578 = vpop.f32.mrb[0].mxu0
        %v579 = vadd.f32 %v396, %v578
        %580 = vmatprep.mubr.f32.mxu0 0.0
        %581 = vmatmul.mubr.f32.gmra.mrb[0].mxu0 %v312
        %v582 = vpop.f32.mrb[0].mxu0
        %v583 = vadd.f32 %v392, %v582
        %v584 = vpop.f32.mrb[0].mxu0
        %v585 = vadd.f32 %v396, %v584
        %586 = vmatprep.mubr.f32.mxu0 0.0
        %587 = vmatmul.mubr.f32.gmra.mrb[0].mxu0 %v313
        %v588 = vpop.f32.mrb[0].mxu0
        %v589 = vpop.f32.mrb[0].mxu0
        %590 = vmatprep.mubr.f32.mxu0 0.0
        %591 = vmatmul.mubr.f32.gmra.mrb[0].mxu0 %v314
        %v592 = vpop.f32.mrb[0].mxu0
        %v593 = vpop.f32.mrb[0].mxu0
        %594 = vdwg.mxu0
        %v595 = vld [vmem:[%s2] sm:$0xff]
        %v596 = vld [vmem:[%s2 + $0x8] sm:$0xff]
        %v597 = vld [vmem:[%s2 + $0x10] sm:$0xff]
        %v598 = vld [vmem:[%s2 + $0x18] sm:$0xff]
        %v599 = vld [vmem:[%s2 + $0x20] sm:$0xff]
        %v600 = vld [vmem:[%s2 + $0x28] sm:$0xff]
        %v601 = vld [vmem:[%s2 + $0x30] sm:$0xff]
        %v602 = vld [vmem:[%s2 + $0x38] sm:$0xff]
        %v603 = vld [vmem:[%s2 + $0x40] sm:$0xff]
        %v604 = vld [vmem:[%s2 + $0x48] sm:$0xff]
        %v605 = vld [vmem:[%s2 + $0x50] sm:$0xff]
        %v606 = vld [vmem:[%s2 + $0x58] sm:$0xff]
        %v607 = vld [vmem:[%s2 + $0x60] sm:$0xff]
        %v608 = vld [vmem:[%s2 + $0x68] sm:$0xff]
        %v609 = vld [vmem:[%s2 + $0x70] sm:$0xff]
        %v610 = vld [vmem:[%s2 + $0x78] sm:$0xff]
        %v611 = vld [vmem:[%s2 + $0x80] sm:$0xff]
        %v612 = vld [vmem:[%s2 + $0x88] sm:$0xff]
        %v613 = vld [vmem:[%s2 + $0x90] sm:$0xff]
        %v614 = vld [vmem:[%s2 + $0x98] sm:$0xff]
        %v615 = vld [vmem:[%s2 + $0xa0] sm:$0xff]
        %v616 = vld [vmem:[%s2 + $0xa8] sm:$0xff]
        %v617 = vld [vmem:[%s2 + $0xb0] sm:$0xff]
        %v618 = vld [vmem:[%s2 + $0xb8] sm:$0xff]
        %v619 = vld [vmem:[%s2 + $0xc0] sm:$0xff]
        %v620 = vld [vmem:[%s2 + $0xc8] sm:$0xff]
        %v621 = vld [vmem:[%s2 + $0xd0] sm:$0xff]
        %v622 = vld [vmem:[%s2 + $0xd8] sm:$0xff]
        %v623 = vld [vmem:[%s2 + $0xe0] sm:$0xff]
        %v624 = vld [vmem:[%s2 + $0xe8] sm:$0xff]
        %v625 = vld [vmem:[%s2 + $0xf0] sm:$0xff]
        %v626 = vld [vmem:[%s2 + $0xf8] sm:$0xff]
        %v627 = vld [vmem:[%s2 + $0x100] sm:$0xff]
        %v628 = vld [vmem:[%s2 + $0x108] sm:$0xff]
        %v629 = vld [vmem:[%s2 + $0x110] sm:$0xff]
        %v630 = vld [vmem:[%s2 + $0x118] sm:$0xff]
        %v631 = vld [vmem:[%s2 + $0x120] sm:$0xff]
        %v632 = vld [vmem:[%s2 + $0x128] sm:$0xff]
        %v633 = vld [vmem:[%s2 + $0x130] sm:$0xff]
        %v634 = vld [vmem:[%s2 + $0x138] sm:$0xff]
        %v635 = vld [vmem:[%s2 + $0x140] sm:$0xff]
        %v636 = vld [vmem:[%s2 + $0x148] sm:$0xff]
        %v637 = vld [vmem:[%s2 + $0x150] sm:$0xff]
        %v638 = vld [vmem:[%s2 + $0x158] sm:$0xff]
        %v639 = vld [vmem:[%s2 + $0x160] sm:$0xff]
        %v640 = vld [vmem:[%s2 + $0x168] sm:$0xff]
        %v641 = vld [vmem:[%s2 + $0x170] sm:$0xff]
        %v642 = vld [vmem:[%s2 + $0x178] sm:$0xff]
        %v643 = vld [vmem:[%s2 + $0x180] sm:$0xff]
        %v644 = vld [vmem:[%s2 + $0x188] sm:$0xff]
        %v645 = vld [vmem:[%s2 + $0x190] sm:$0xff]
        %v646 = vld [vmem:[%s2 + $0x198] sm:$0xff]
        %v647 = vld [vmem:[%s2 + $0x1a0] sm:$0xff]
        %v648 = vld [vmem:[%s2 + $0x1a8] sm:$0xff]
        %v649 = vld [vmem:[%s2 + $0x1b0] sm:$0xff]
        %v650 = vld [vmem:[%s2 + $0x1b8] sm:$0xff]
        %v651 = vld [vmem:[%s2 + $0x1c0] sm:$0xff]
        %v652 = vld [vmem:[%s2 + $0x1c8] sm:$0xff]
        %v653 = vld [vmem:[%s2 + $0x1d0] sm:$0xff]
        %v654 = vld [vmem:[%s2 + $0x1d8] sm:$0xff]
        %v655 = vld [vmem:[%s2 + $0x1e0] sm:$0xff]
        %v656 = vld [vmem:[%s2 + $0x1e8] sm:$0xff]
        %v657 = vld [vmem:[%s2 + $0x1f0] sm:$0xff]
        %v658 = vld [vmem:[%s2 + $0x1f8] sm:$0xff]
        %659 = vmatprep.subr.mxu0 %v596
        %660 = vmatpush1.msra.mxu0 %v595
        %661 = vmatprep.subr.mxu0 %v600
        %662 = vmatpush1.msra.mxu0 %v599
        %663 = vmatprep.subr.mxu0 %v604
        %664 = vmatpush1.msra.mxu0 %v603
        %665 = vmatprep.subr.mxu0 %v608
        %666 = vmatpush1.msra.mxu0 %v607
        %667 = vmatprep.subr.mxu0 %v612
        %668 = vmatpush1.msra.mxu0 %v611
        %669 = vmatprep.subr.mxu0 %v616
        %670 = vmatpush1.msra.mxu0 %v615
        %671 = vmatprep.subr.mxu0 %v620
        %672 = vmatpush1.msra.mxu0 %v619
        %673 = vmatprep.subr.mxu0 %v624
        %674 = vmatpush1.msra.mxu0 %v623
        %675 = vmatprep.subr.mxu0 %v628
        %676 = vmatpush1.msra.mxu0 %v627
        %677 = vmatprep.subr.mxu0 %v632
        %678 = vmatpush1.msra.mxu0 %v631
        %679 = vmatprep.subr.mxu0 %v636
        %680 = vmatpush1.msra.mxu0 %v635
        %681 = vmatprep.subr.mxu0 %v640
        %682 = vmatpush1.msra.mxu0 %v639
        %683 = vmatprep.subr.mxu0 %v644
        %684 = vmatpush1.msra.mxu0 %v643
        %685 = vmatprep.subr.mxu0 %v648
        %686 = vmatpush1.msra.mxu0 %v647
        %687 = vmatprep.subr.mxu0 %v652
        %688 = vmatpush1.msra.mxu0 %v651
        %689 = vmatprep.subr.mxu0 %v656
        %690 = vmatpush1.msra.mxu0 %v655
        %691 = vmatprep.subr.mxu0 0.0
        %692 = vmatpush1.msra.mxu0 0.0
        %693 = vmatprep.subr.mxu0 0.0
        %694 = vmatpush1.msra.mxu0 0.0
        %695 = vmatprep.subr.mxu0 0.0
        %696 = vmatpush1.msra.mxu0 0.0
        %697 = vmatprep.subr.mxu0 0.0
        %698 = vmatpush1.msra.mxu0 0.0
        %699 = vmatprep.subr.mxu0 0.0
        %700 = vmatpush1.msra.mxu0 0.0
        %701 = vmatprep.subr.mxu0 0.0
        %702 = vmatpush1.msra.mxu0 0.0
        %703 = vmatprep.subr.mxu0 0.0
        %704 = vmatpush1.msra.mxu0 0.0
        %705 = vmatprep.subr.mxu0 0.0
        %706 = vmatpush1.msra.mxu0 0.0
        %707 = vmatprep.subr.mxu0 0.0
        %708 = vmatpush1.msra.mxu0 0.0
        %709 = vmatprep.subr.mxu0 0.0
        %710 = vmatpush1.msra.mxu0 0.0
        %711 = vmatprep.subr.mxu0 0.0
        %712 = vmatpush1.msra.mxu0 0.0
        %713 = vmatprep.subr.mxu0 0.0
        %714 = vmatpush1.msra.mxu0 0.0
        %715 = vmatprep.subr.mxu0 0.0
        %716 = vmatpush1.msra.mxu0 0.0
        %717 = vmatprep.subr.mxu0 0.0
        %718 = vmatpush1.msra.mxu0 0.0
        %719 = vmatprep.subr.mxu0 0.0
        %720 = vmatpush1.msra.mxu0 0.0
        %721 = vmatprep.subr.mxu0 0.0
        %722 = vmatpush1.msra.mxu0 0.0
        %723 = vmatprep.mubr.f32.mxu0 0.0
        %724 = vmatmul.mubr.f32.gmra.mrb[0].mxu0 %v309
        %v725 = vpop.f32.mrb[0].mxu0
        %v726 = vpop.f32.mrb[0].mxu0
        %727 = vmatprep.mubr.f32.mxu0 0.0
        %728 = vmatmul.mubr.f32.gmra.mrb[0].mxu0 %v310
        %v729 = vpop.f32.mrb[0].mxu0
        %v730 = vpop.f32.mrb[0].mxu0
        %731 = vmatprep.mubr.f32.mxu0 0.0
        %732 = vmatmul.mubr.f32.gmra.mrb[0].mxu0 %v311
        %v733 = vpop.f32.mrb[0].mxu0
        %v734 = vadd.f32 0.0, %v733
        %v735 = vpop.f32.mrb[0].mxu0
        %v736 = vadd.f32 0.0, %v735
        %737 = vmatprep.mubr.f32.mxu0 0.0
        %738 = vmatmul.mubr.f32.gmra.mrb[0].mxu0 %v312
        %v739 = vpop.f32.mrb[0].mxu0
        %v740 = vadd.f32 0.0, %v739
        %v741 = vpop.f32.mrb[0].mxu0
        %v742 = vadd.f32 0.0, %v741
        %743 = vmatprep.mubr.f32.mxu0 0.0
        %744 = vmatmul.mubr.f32.gmra.mrb[0].mxu0 %v313
        %v745 = vpop.f32.mrb[0].mxu0
        %v746 = vadd.f32 0.0, %v745
        %v747 = vpop.f32.mrb[0].mxu0
        %v748 = vadd.f32 0.0, %v747
        %749 = vmatprep.mubr.f32.mxu0 0.0
        %750 = vmatmul.mubr.f32.gmra.mrb[0].mxu0 %v314
        %v751 = vpop.f32.mrb[0].mxu0
        %v752 = vadd.f32 0.0, %v751
        %v753 = vpop.f32.mrb[0].mxu0
        %v754 = vadd.f32 0.0, %v753
        %755 = vdwg.mxu0
        %756 = vmatprep.subr.mxu0 %v598
        %757 = vmatpush1.msra.mxu0 %v597
        %758 = vmatprep.subr.mxu0 %v602
        %759 = vmatpush1.msra.mxu0 %v601
        %760 = vmatprep.subr.mxu0 %v606
        %761 = vmatpush1.msra.mxu0 %v605
        %762 = vmatprep.subr.mxu0 %v610
        %763 = vmatpush1.msra.mxu0 %v609
        %764 = vmatprep.subr.mxu0 %v614
        %765 = vmatpush1.msra.mxu0 %v613
        %766 = vmatprep.subr.mxu0 %v618
        %767 = vmatpush1.msra.mxu0 %v617
        %768 = vmatprep.subr.mxu0 %v622
        %769 = vmatpush1.msra.mxu0 %v621
        %770 = vmatprep.subr.mxu0 %v626
        %771 = vmatpush1.msra.mxu0 %v625
        %772 = vmatprep.subr.mxu0 %v630
        %773 = vmatpush1.msra.mxu0 %v629
        %774 = vmatprep.subr.mxu0 %v634
        %775 = vmatpush1.msra.mxu0 %v633
        %776 = vmatprep.subr.mxu0 %v638
        %777 = vmatpush1.msra.mxu0 %v637
        %778 = vmatprep.subr.mxu0 %v642
        %779 = vmatpush1.msra.mxu0 %v641
        %780 = vmatprep.subr.mxu0 %v646
        %781 = vmatpush1.msra.mxu0 %v645
        %782 = vmatprep.subr.mxu0 %v650
        %783 = vmatpush1.msra.mxu0 %v649
        %784 = vmatprep.subr.mxu0 %v654
        %785 = vmatpush1.msra.mxu0 %v653
        %786 = vmatprep.subr.mxu0 %v658
        %787 = vmatpush1.msra.mxu0 %v657
        %788 = vmatprep.subr.mxu0 0.0
        %789 = vmatpush1.msra.mxu0 0.0
        %790 = vmatprep.subr.mxu0 0.0
        %791 = vmatpush1.msra.mxu0 0.0
        %792 = vmatprep.subr.mxu0 0.0
        %793 = vmatpush1.msra.mxu0 0.0
        %794 = vmatprep.subr.mxu0 0.0
        %795 = vmatpush1.msra.mxu0 0.0
        %796 = vmatprep.subr.mxu0 0.0
        %797 = vmatpush1.msra.mxu0 0.0
        %798 = vmatprep.subr.mxu0 0.0
        %799 = vmatpush1.msra.mxu0 0.0
        %800 = vmatprep.subr.mxu0 0.0
        %801 = vmatpush1.msra.mxu0 0.0
        %802 = vmatprep.subr.mxu0 0.0
        %803 = vmatpush1.msra.mxu0 0.0
        %804 = vmatprep.subr.mxu0 0.0
        %805 = vmatpush1.msra.mxu0 0.0
        %806 = vmatprep.subr.mxu0 0.0
        %807 = vmatpush1.msra.mxu0 0.0
        %808 = vmatprep.subr.mxu0 0.0
        %809 = vmatpush1.msra.mxu0 0.0
        %810 = vmatprep.subr.mxu0 0.0
        %811 = vmatpush1.msra.mxu0 0.0
        %812 = vmatprep.subr.mxu0 0.0
        %813 = vmatpush1.msra.mxu0 0.0
        %814 = vmatprep.subr.mxu0 0.0
        %815 = vmatpush1.msra.mxu0 0.0
        %816 = vmatprep.subr.mxu0 0.0
        %817 = vmatpush1.msra.mxu0 0.0
        %818 = vmatprep.subr.mxu0 0.0
        %819 = vmatpush1.msra.mxu0 0.0
        %820 = vmatprep.mubr.f32.mxu0 0.0
        %821 = vmatmul.mubr.f32.gmra.mrb[0].mxu0 %v309
        %v822 = vpop.f32.mrb[0].mxu0
        %v823 = vpop.f32.mrb[0].mxu0
        %824 = vmatprep.mubr.f32.mxu0 0.0
        %825 = vmatmul.mubr.f32.gmra.mrb[0].mxu0 %v310
        %v826 = vpop.f32.mrb[0].mxu0
        %v827 = vpop.f32.mrb[0].mxu0
        %828 = vmatprep.mubr.f32.mxu0 0.0
        %829 = vmatmul.mubr.f32.gmra.mrb[0].mxu0 %v311
        %v830 = vpop.f32.mrb[0].mxu0
        %v831 = vadd.f32 0.0, %v830
        %v832 = vpop.f32.mrb[0].mxu0
        %v833 = vadd.f32 0.0, %v832
        %834 = vmatprep.mubr.f32.mxu0 0.0
        %835 = vmatmul.mubr.f32.gmra.mrb[0].mxu0 %v312
        %v836 = vpop.f32.mrb[0].mxu0
        %v837 = vadd.f32 0.0, %v836
        %v838 = vpop.f32.mrb[0].mxu0
        %v839 = vadd.f32 0.0, %v838
        %840 = vmatprep.mubr.f32.mxu0 0.0
        %841 = vmatmul.mubr.f32.gmra.mrb[0].mxu0 %v313
        %v842 = vpop.f32.mrb[0].mxu0
        %v843 = vadd.f32 0.0, %v842
        %v844 = vpop.f32.mrb[0].mxu0
        %v845 = vadd.f32 0.0, %v844
        %846 = vmatprep.mubr.f32.mxu0 0.0
        %847 = vmatmul.mubr.f32.gmra.mrb[0].mxu0 %v314
        %v848 = vpop.f32.mrb[0].mxu0
        %v849 = vadd.f32 0.0, %v848
        %v850 = vpop.f32.mrb[0].mxu0
        %v851 = vadd.f32 0.0, %v850
        %852 = vdwg.mxu0
        %v853 = vadd.f32 %v468, %v734
        %v854 = vadd.f32 %v470, %v736
        %v855 = vadd.f32 %v565, %v831
        %v856 = vadd.f32 %v567, %v833
        %v857 = vadd.f32 %v474, %v740
        %v858 = vadd.f32 %v476, %v742
        %v859 = vadd.f32 %v571, %v837
        %v860 = vadd.f32 %v573, %v839
        %v861 = vmax.f32 %v853, 0.0
        %v862 = vmax.f32 %v854, 0.0
        %v863 = vmax.f32 %v855, 0.0
        %v864 = vmax.f32 %v856, 0.0
        %v865 = vmax.f32 %v857, 0.0
        %v866 = vmax.f32 %v858, 0.0
        %v867 = vmax.f32 %v859, 0.0
        %v868 = vmax.f32 %v860, 0.0
        %v869 = vld [vmem:[%s4] sm:$0xff]
        %v870 = vld [vmem:[%s4 + $0x8] sm:$0xff]
        %v871 = vld [vmem:[%s4 + $0x10] sm:$0xff]
        %v872 = vld [vmem:[%s4 + $0x18] sm:$0xff]
        %v873 = vld [vmem:[%s4 + $0x20] sm:$0xff]
        %v874 = vld [vmem:[%s4 + $0x28] sm:$0xff]
        %v875 = vld [vmem:[%s4 + $0x30] sm:$0xff]
        %v876 = vld [vmem:[%s4 + $0x38] sm:$0xff]
        %v877 = vld [vmem:[%s4 + $0x40] sm:$0xff]
        %v878 = vld [vmem:[%s4 + $0x48] sm:$0xff]
        %v879 = vld [vmem:[%s4 + $0x50] sm:$0xff]
        %v880 = vld [vmem:[%s4 + $0x58] sm:$0xff]
        %v881 = vld [vmem:[%s4 + $0x60] sm:$0xff]
        %v882 = vld [vmem:[%s4 + $0x68] sm:$0xff]
        %v883 = vld [vmem:[%s4 + $0x70] sm:$0xff]
        %v884 = vld [vmem:[%s4 + $0x78] sm:$0xff]
        %v885 = vld [vmem:[%s4 + $0x80] sm:$0xff]
        %v886 = vld [vmem:[%s4 + $0x88] sm:$0xff]
        %v887 = vld [vmem:[%s4 + $0x90] sm:$0xff]
        %v888 = vld [vmem:[%s4 + $0x98] sm:$0xff]
        %v889 = vld [vmem:[%s4 + $0xa0] sm:$0xff]
        %v890 = vld [vmem:[%s4 + $0xa8] sm:$0xff]
        %v891 = vld [vmem:[%s4 + $0xb0] sm:$0xff]
        %v892 = vld [vmem:[%s4 + $0xb8] sm:$0xff]
        %v893 = vld [vmem:[%s4 + $0xc0] sm:$0xff]
        %v894 = vld [vmem:[%s4 + $0xc8] sm:$0xff]
        %v895 = vld [vmem:[%s4 + $0xd0] sm:$0xff]
        %v896 = vld [vmem:[%s4 + $0xd8] sm:$0xff]
        %v897 = vld [vmem:[%s4 + $0xe0] sm:$0xff]
        %v898 = vld [vmem:[%s4 + $0xe8] sm:$0xff]
        %v899 = vld [vmem:[%s4 + $0xf0] sm:$0xff]
        %v900 = vld [vmem:[%s4 + $0xf8] sm:$0xff]
        %v901 = vld [vmem:[%s4 + $0x100] sm:$0xff]
        %v902 = vld [vmem:[%s4 + $0x108] sm:$0xff]
        %v903 = vld [vmem:[%s4 + $0x110] sm:$0xff]
        %v904 = vld [vmem:[%s4 + $0x118] sm:$0xff]
        %v905 = vld [vmem:[%s4 + $0x120] sm:$0xff]
        %v906 = vld [vmem:[%s4 + $0x128] sm:$0xff]
        %v907 = vld [vmem:[%s4 + $0x130] sm:$0xff]
        %v908 = vld [vmem:[%s4 + $0x138] sm:$0xff]
        %v909 = vld [vmem:[%s4 + $0x140] sm:$0xff]
        %v910 = vld [vmem:[%s4 + $0x148] sm:$0xff]
        %v911 = vld [vmem:[%s4 + $0x150] sm:$0xff]
        %v912 = vld [vmem:[%s4 + $0x158] sm:$0xff]
        %v913 = vld [vmem:[%s4 + $0x160] sm:$0xff]
        %v914 = vld [vmem:[%s4 + $0x168] sm:$0xff]
        %v915 = vld [vmem:[%s4 + $0x170] sm:$0xff]
        %v916 = vld [vmem:[%s4 + $0x178] sm:$0xff]
        %v917 = vld [vmem:[%s4 + $0x180] sm:$0xff]
        %v918 = vld [vmem:[%s4 + $0x188] sm:$0xff]
        %v919 = vld [vmem:[%s4 + $0x190] sm:$0xff]
        %v920 = vld [vmem:[%s4 + $0x198] sm:$0xff]
        %v921 = vld [vmem:[%s4 + $0x1a0] sm:$0xff]
        %v922 = vld [vmem:[%s4 + $0x1a8] sm:$0xff]
        %v923 = vld [vmem:[%s4 + $0x1b0] sm:$0xff]
        %v924 = vld [vmem:[%s4 + $0x1b8] sm:$0xff]
        %v925 = vld [vmem:[%s4 + $0x1c0] sm:$0xff]
        %v926 = vld [vmem:[%s4 + $0x1c8] sm:$0xff]
        %v927 = vld [vmem:[%s4 + $0x1d0] sm:$0xff]
        %v928 = vld [vmem:[%s4 + $0x1d8] sm:$0xff]
        %v929 = vld [vmem:[%s4 + $0x1e0] sm:$0xff]
        %v930 = vld [vmem:[%s4 + $0x1e8] sm:$0xff]
        %v931 = vld [vmem:[%s4 + $0x1f0] sm:$0xff]
        %v932 = vld [vmem:[%s4 + $0x1f8] sm:$0xff]
        %v933 = vadd.f32 %v468, %v746
        %v934 = vadd.f32 %v470, %v748
        %v935 = vadd.f32 %v565, %v843
        %v936 = vadd.f32 %v567, %v845
        %v937 = vadd.f32 %v474, %v752
        %v938 = vadd.f32 %v476, %v754
        %v939 = vadd.f32 %v571, %v849
        %v940 = vadd.f32 %v573, %v851
        %v941 = vmax.f32 %v933, 0.0
        %v942 = vmax.f32 %v934, 0.0
        %v943 = vmax.f32 %v935, 0.0
        %v944 = vmax.f32 %v936, 0.0
        %v945 = vmax.f32 %v937, 0.0
        %v946 = vmax.f32 %v938, 0.0
        %v947 = vmax.f32 %v939, 0.0
        %v948 = vmax.f32 %v940, 0.0
        %s949 = scalar_lea.vmem %s4, 512
        %v950 = vld [vmem:[%s949] sm:$0xff]
        %v951 = vld [vmem:[%s949 + $0x8] sm:$0xff]
        %v952 = vld [vmem:[%s949 + $0x10] sm:$0xff]
        %v953 = vld [vmem:[%s949 + $0x18] sm:$0xff]
        %v954 = vld [vmem:[%s949 + $0x20] sm:$0xff]
        %v955 = vld [vmem:[%s949 + $0x28] sm:$0xff]
        %v956 = vld [vmem:[%s949 + $0x30] sm:$0xff]
        %v957 = vld [vmem:[%s949 + $0x38] sm:$0xff]
        %v958 = vld [vmem:[%s949 + $0x40] sm:$0xff]
        %v959 = vld [vmem:[%s949 + $0x48] sm:$0xff]
        %v960 = vld [vmem:[%s949 + $0x50] sm:$0xff]
        %v961 = vld [vmem:[%s949 + $0x58] sm:$0xff]
        %v962 = vld [vmem:[%s949 + $0x60] sm:$0xff]
        %v963 = vld [vmem:[%s949 + $0x68] sm:$0xff]
        %v964 = vld [vmem:[%s949 + $0x70] sm:$0xff]
        %v965 = vld [vmem:[%s949 + $0x78] sm:$0xff]
        %v966 = vld [vmem:[%s949 + $0x80] sm:$0xff]
        %v967 = vld [vmem:[%s949 + $0x88] sm:$0xff]
        %v968 = vld [vmem:[%s949 + $0x90] sm:$0xff]
        %v969 = vld [vmem:[%s949 + $0x98] sm:$0xff]
        %v970 = vld [vmem:[%s949 + $0xa0] sm:$0xff]
        %v971 = vld [vmem:[%s949 + $0xa8] sm:$0xff]
        %v972 = vld [vmem:[%s949 + $0xb0] sm:$0xff]
        %v973 = vld [vmem:[%s949 + $0xb8] sm:$0xff]
        %v974 = vld [vmem:[%s949 + $0xc0] sm:$0xff]
        %v975 = vld [vmem:[%s949 + $0xc8] sm:$0xff]
        %v976 = vld [vmem:[%s949 + $0xd0] sm:$0xff]
        %v977 = vld [vmem:[%s949 + $0xd8] sm:$0xff]
        %v978 = vld [vmem:[%s949 + $0xe0] sm:$0xff]
        %v979 = vld [vmem:[%s949 + $0xe8] sm:$0xff]
        %v980 = vld [vmem:[%s949 + $0xf0] sm:$0xff]
        %v981 = vld [vmem:[%s949 + $0xf8] sm:$0xff]
        %v982 = vld [vmem:[%s949 + $0x100] sm:$0xff]
        %v983 = vld [vmem:[%s949 + $0x108] sm:$0xff]
        %v984 = vld [vmem:[%s949 + $0x110] sm:$0xff]
        %v985 = vld [vmem:[%s949 + $0x118] sm:$0xff]
        %v986 = vld [vmem:[%s949 + $0x120] sm:$0xff]
        %v987 = vld [vmem:[%s949 + $0x128] sm:$0xff]
        %v988 = vld [vmem:[%s949 + $0x130] sm:$0xff]
        %v989 = vld [vmem:[%s949 + $0x138] sm:$0xff]
        %v990 = vld [vmem:[%s949 + $0x140] sm:$0xff]
        %v991 = vld [vmem:[%s949 + $0x148] sm:$0xff]
        %v992 = vld [vmem:[%s949 + $0x150] sm:$0xff]
        %v993 = vld [vmem:[%s949 + $0x158] sm:$0xff]
        %v994 = vld [vmem:[%s949 + $0x160] sm:$0xff]
        %v995 = vld [vmem:[%s949 + $0x168] sm:$0xff]
        %v996 = vld [vmem:[%s949 + $0x170] sm:$0xff]
        %v997 = vld [vmem:[%s949 + $0x178] sm:$0xff]
        %v998 = vld [vmem:[%s949 + $0x180] sm:$0xff]
        %v999 = vld [vmem:[%s949 + $0x188] sm:$0xff]
        %v1000 = vld [vmem:[%s949 + $0x190] sm:$0xff]
        %v1001 = vld [vmem:[%s949 + $0x198] sm:$0xff]
        %v1002 = vld [vmem:[%s949 + $0x1a0] sm:$0xff]
        %v1003 = vld [vmem:[%s949 + $0x1a8] sm:$0xff]
        %v1004 = vld [vmem:[%s949 + $0x1b0] sm:$0xff]
        %v1005 = vld [vmem:[%s949 + $0x1b8] sm:$0xff]
        %v1006 = vld [vmem:[%s949 + $0x1c0] sm:$0xff]
        %v1007 = vld [vmem:[%s949 + $0x1c8] sm:$0xff]
        %v1008 = vld [vmem:[%s949 + $0x1d0] sm:$0xff]
        %v1009 = vld [vmem:[%s949 + $0x1d8] sm:$0xff]
        %v1010 = vld [vmem:[%s949 + $0x1e0] sm:$0xff]
        %v1011 = vld [vmem:[%s949 + $0x1e8] sm:$0xff]
        %v1012 = vld [vmem:[%s949 + $0x1f0] sm:$0xff]
        %v1013 = vld [vmem:[%s949 + $0x1f8] sm:$0xff]
        %1014 = vmatprep.subr.mxu0 0.0
        %1015 = vmatpush1.msra.mxu0 %v950
        %1016 = vmatprep.subr.mxu0 0.0
        %1017 = vmatpush1.msra.mxu0 %v951
        %1018 = vmatprep.subr.mxu0 0.0
        %1019 = vmatpush1.msra.mxu0 %v952
        %1020 = vmatprep.subr.mxu0 0.0
        %1021 = vmatpush1.msra.mxu0 %v953
        %1022 = vmatprep.subr.mxu0 0.0
        %1023 = vmatpush1.msra.mxu0 %v954
        %1024 = vmatprep.subr.mxu0 0.0
        %1025 = vmatpush1.msra.mxu0 %v955
        %1026 = vmatprep.subr.mxu0 0.0
        %1027 = vmatpush1.msra.mxu0 %v956
        %1028 = vmatprep.subr.mxu0 0.0
        %1029 = vmatpush1.msra.mxu0 %v957
        %1030 = vmatprep.subr.mxu0 0.0
        %1031 = vmatpush1.msra.mxu0 %v958
        %1032 = vmatprep.subr.mxu0 0.0
        %1033 = vmatpush1.msra.mxu0 %v959
        %1034 = vmatprep.subr.mxu0 0.0
        %1035 = vmatpush1.msra.mxu0 %v960
        %1036 = vmatprep.subr.mxu0 0.0
        %1037 = vmatpush1.msra.mxu0 %v961
        %1038 = vmatprep.subr.mxu0 0.0
        %1039 = vmatpush1.msra.mxu0 %v962
        %1040 = vmatprep.subr.mxu0 0.0
        %1041 = vmatpush1.msra.mxu0 %v963
        %1042 = vmatprep.subr.mxu0 0.0
        %1043 = vmatpush1.msra.mxu0 %v964
        %1044 = vmatprep.subr.mxu0 0.0
        %1045 = vmatpush1.msra.mxu0 %v965
        %1046 = vmatprep.subr.mxu0 0.0
        %1047 = vmatpush1.msra.mxu0 %v966
        %1048 = vmatprep.subr.mxu0 0.0
        %1049 = vmatpush1.msra.mxu0 %v967
        %1050 = vmatprep.subr.mxu0 0.0
        %1051 = vmatpush1.msra.mxu0 %v968
        %1052 = vmatprep.subr.mxu0 0.0
        %1053 = vmatpush1.msra.mxu0 %v969
        %1054 = vmatprep.subr.mxu0 0.0
        %1055 = vmatpush1.msra.mxu0 %v970
        %1056 = vmatprep.subr.mxu0 0.0
        %1057 = vmatpush1.msra.mxu0 %v971
        %1058 = vmatprep.subr.mxu0 0.0
        %1059 = vmatpush1.msra.mxu0 %v972
        %1060 = vmatprep.subr.mxu0 0.0
        %1061 = vmatpush1.msra.mxu0 %v973
        %1062 = vmatprep.subr.mxu0 0.0
        %1063 = vmatpush1.msra.mxu0 %v974
        %1064 = vmatprep.subr.mxu0 0.0
        %1065 = vmatpush1.msra.mxu0 %v975
        %1066 = vmatprep.subr.mxu0 0.0
        %1067 = vmatpush1.msra.mxu0 %v976
        %1068 = vmatprep.subr.mxu0 0.0
        %1069 = vmatpush1.msra.mxu0 %v977
        %1070 = vmatprep.subr.mxu0 0.0
        %1071 = vmatpush1.msra.mxu0 %v978
        %1072 = vmatprep.subr.mxu0 0.0
        %1073 = vmatpush1.msra.mxu0 %v979
        %1074 = vmatprep.subr.mxu0 0.0
        %1075 = vmatpush1.msra.mxu0 %v980
        %1076 = vmatprep.subr.mxu0 0.0
        %1077 = vmatpush1.msra.mxu0 %v981
        %1078 = vmatprep.mubr.f32.mxu0 %v942
        %1079 = vmatmul.mubr.f32.gmra.mrb[0].mxu0 %v941
        %v1080 = vpop.f32.mrb[0].mxu0
        %v1081 = vadd.f32 0.0, %v1080
        %v1082 = vpop.f32.mrb[0].mxu0
        %1083 = vmatprep.mubr.f32.mxu0 %v946
        %1084 = vmatmul.mubr.f32.gmra.mrb[0].mxu0 %v945
        %v1085 = vpop.f32.mrb[0].mxu0
        %v1086 = vadd.f32 0.0, %v1085
        %v1087 = vpop.f32.mrb[0].mxu0
        %1088 = vdwg.mxu0
        %1089 = vmatprep.subr.mxu0 0.0
        %1090 = vmatpush1.msra.mxu0 %v982
        %1091 = vmatprep.subr.mxu0 0.0
        %1092 = vmatpush1.msra.mxu0 %v983
        %1093 = vmatprep.subr.mxu0 0.0
        %1094 = vmatpush1.msra.mxu0 %v984
        %1095 = vmatprep.subr.mxu0 0.0
        %1096 = vmatpush1.msra.mxu0 %v985
        %1097 = vmatprep.subr.mxu0 0.0
        %1098 = vmatpush1.msra.mxu0 %v986
        %1099 = vmatprep.subr.mxu0 0.0
        %1100 = vmatpush1.msra.mxu0 %v987
        %1101 = vmatprep.subr.mxu0 0.0
        %1102 = vmatpush1.msra.mxu0 %v988
        %1103 = vmatprep.subr.mxu0 0.0
        %1104 = vmatpush1.msra.mxu0 %v989
        %1105 = vmatprep.subr.mxu0 0.0
        %1106 = vmatpush1.msra.mxu0 %v990
        %1107 = vmatprep.subr.mxu0 0.0
        %1108 = vmatpush1.msra.mxu0 %v991
        %1109 = vmatprep.subr.mxu0 0.0
        %1110 = vmatpush1.msra.mxu0 %v992
        %1111 = vmatprep.subr.mxu0 0.0
        %1112 = vmatpush1.msra.mxu0 %v993
        %1113 = vmatprep.subr.mxu0 0.0
        %1114 = vmatpush1.msra.mxu0 %v994
        %1115 = vmatprep.subr.mxu0 0.0
        %1116 = vmatpush1.msra.mxu0 %v995
        %1117 = vmatprep.subr.mxu0 0.0
        %1118 = vmatpush1.msra.mxu0 %v996
        %1119 = vmatprep.subr.mxu0 0.0
        %1120 = vmatpush1.msra.mxu0 %v997
        %1121 = vmatprep.subr.mxu0 0.0
        %1122 = vmatpush1.msra.mxu0 %v998
        %1123 = vmatprep.subr.mxu0 0.0
        %1124 = vmatpush1.msra.mxu0 %v999
        %1125 = vmatprep.subr.mxu0 0.0
        %1126 = vmatpush1.msra.mxu0 %v1000
        %1127 = vmatprep.subr.mxu0 0.0
        %1128 = vmatpush1.msra.mxu0 %v1001
        %1129 = vmatprep.subr.mxu0 0.0
        %1130 = vmatpush1.msra.mxu0 %v1002
        %1131 = vmatprep.subr.mxu0 0.0
        %1132 = vmatpush1.msra.mxu0 %v1003
        %1133 = vmatprep.subr.mxu0 0.0
        %1134 = vmatpush1.msra.mxu0 %v1004
        %1135 = vmatprep.subr.mxu0 0.0
        %1136 = vmatpush1.msra.mxu0 %v1005
        %1137 = vmatprep.subr.mxu0 0.0
        %1138 = vmatpush1.msra.mxu0 %v1006
        %1139 = vmatprep.subr.mxu0 0.0
        %1140 = vmatpush1.msra.mxu0 %v1007
        %1141 = vmatprep.subr.mxu0 0.0
        %1142 = vmatpush1.msra.mxu0 %v1008
        %1143 = vmatprep.subr.mxu0 0.0
        %1144 = vmatpush1.msra.mxu0 %v1009
        %1145 = vmatprep.subr.mxu0 0.0
        %1146 = vmatpush1.msra.mxu0 %v1010
        %1147 = vmatprep.subr.mxu0 0.0
        %1148 = vmatpush1.msra.mxu0 %v1011
        %1149 = vmatprep.subr.mxu0 0.0
        %1150 = vmatpush1.msra.mxu0 %v1012
        %1151 = vmatprep.subr.mxu0 0.0
        %1152 = vmatpush1.msra.mxu0 %v1013
        %1153 = vmatprep.mubr.f32.mxu0 %v944
        %1154 = vmatmul.mubr.f32.gmra.mrb[0].mxu0 %v943
        %v1155 = vpop.f32.mrb[0].mxu0
        %v1156 = vadd.f32 %v1081, %v1155
        %v1157 = vpop.f32.mrb[0].mxu0
        %1158 = vmatprep.mubr.f32.mxu0 %v948
        %1159 = vmatmul.mubr.f32.gmra.mrb[0].mxu0 %v947
        %v1160 = vpop.f32.mrb[0].mxu0
        %v1161 = vadd.f32 %v1086, %v1160
        %v1162 = vpop.f32.mrb[0].mxu0
        %1163 = vdwg.mxu0
        %1164 = vmatprep.subr.mxu0 0.0
        %1165 = vmatpush1.msra.mxu0 %v869
        %1166 = vmatprep.subr.mxu0 0.0
        %1167 = vmatpush1.msra.mxu0 %v870
        %1168 = vmatprep.subr.mxu0 0.0
        %1169 = vmatpush1.msra.mxu0 %v871
        %1170 = vmatprep.subr.mxu0 0.0
        %1171 = vmatpush1.msra.mxu0 %v872
        %1172 = vmatprep.subr.mxu0 0.0
        %1173 = vmatpush1.msra.mxu0 %v873
        %1174 = vmatprep.subr.mxu0 0.0
        %1175 = vmatpush1.msra.mxu0 %v874
        %1176 = vmatprep.subr.mxu0 0.0
        %1177 = vmatpush1.msra.mxu0 %v875
        %1178 = vmatprep.subr.mxu0 0.0
        %1179 = vmatpush1.msra.mxu0 %v876
        %1180 = vmatprep.subr.mxu0 0.0
        %1181 = vmatpush1.msra.mxu0 %v877
        %1182 = vmatprep.subr.mxu0 0.0
        %1183 = vmatpush1.msra.mxu0 %v878
        %1184 = vmatprep.subr.mxu0 0.0
        %1185 = vmatpush1.msra.mxu0 %v879
        %1186 = vmatprep.subr.mxu0 0.0
        %1187 = vmatpush1.msra.mxu0 %v880
        %1188 = vmatprep.subr.mxu0 0.0
        %1189 = vmatpush1.msra.mxu0 %v881
        %1190 = vmatprep.subr.mxu0 0.0
        %1191 = vmatpush1.msra.mxu0 %v882
        %1192 = vmatprep.subr.mxu0 0.0
        %1193 = vmatpush1.msra.mxu0 %v883
        %1194 = vmatprep.subr.mxu0 0.0
        %1195 = vmatpush1.msra.mxu0 %v884
        %1196 = vmatprep.subr.mxu0 0.0
        %1197 = vmatpush1.msra.mxu0 %v885
        %1198 = vmatprep.subr.mxu0 0.0
        %1199 = vmatpush1.msra.mxu0 %v886
        %1200 = vmatprep.subr.mxu0 0.0
        %1201 = vmatpush1.msra.mxu0 %v887
        %1202 = vmatprep.subr.mxu0 0.0
        %1203 = vmatpush1.msra.mxu0 %v888
        %1204 = vmatprep.subr.mxu0 0.0
        %1205 = vmatpush1.msra.mxu0 %v889
        %1206 = vmatprep.subr.mxu0 0.0
        %1207 = vmatpush1.msra.mxu0 %v890
        %1208 = vmatprep.subr.mxu0 0.0
        %1209 = vmatpush1.msra.mxu0 %v891
        %1210 = vmatprep.subr.mxu0 0.0
        %1211 = vmatpush1.msra.mxu0 %v892
        %1212 = vmatprep.subr.mxu0 0.0
        %1213 = vmatpush1.msra.mxu0 %v893
        %1214 = vmatprep.subr.mxu0 0.0
        %1215 = vmatpush1.msra.mxu0 %v894
        %1216 = vmatprep.subr.mxu0 0.0
        %1217 = vmatpush1.msra.mxu0 %v895
        %1218 = vmatprep.subr.mxu0 0.0
        %1219 = vmatpush1.msra.mxu0 %v896
        %1220 = vmatprep.subr.mxu0 0.0
        %1221 = vmatpush1.msra.mxu0 %v897
        %1222 = vmatprep.subr.mxu0 0.0
        %1223 = vmatpush1.msra.mxu0 %v898
        %1224 = vmatprep.subr.mxu0 0.0
        %1225 = vmatpush1.msra.mxu0 %v899
        %1226 = vmatprep.subr.mxu0 0.0
        %1227 = vmatpush1.msra.mxu0 %v900
        %1228 = vmatprep.mubr.f32.mxu0 %v862
        %1229 = vmatmul.mubr.f32.gmra.mrb[0].mxu0 %v861
        %v1230 = vpop.f32.mrb[0].mxu0
        %v1231 = vadd.f32 %v1156, %v1230
        %v1232 = vpop.f32.mrb[0].mxu0
        %1233 = vmatprep.mubr.f32.mxu0 %v866
        %1234 = vmatmul.mubr.f32.gmra.mrb[0].mxu0 %v865
        %v1235 = vpop.f32.mrb[0].mxu0
        %v1236 = vadd.f32 %v1161, %v1235
        %v1237 = vpop.f32.mrb[0].mxu0
        %1238 = vdwg.mxu0
        %1239 = vmatprep.subr.mxu0 0.0
        %1240 = vmatpush1.msra.mxu0 %v901
        %1241 = vmatprep.subr.mxu0 0.0
        %1242 = vmatpush1.msra.mxu0 %v902
        %1243 = vmatprep.subr.mxu0 0.0
        %1244 = vmatpush1.msra.mxu0 %v903
        %1245 = vmatprep.subr.mxu0 0.0
        %1246 = vmatpush1.msra.mxu0 %v904
        %1247 = vmatprep.subr.mxu0 0.0
        %1248 = vmatpush1.msra.mxu0 %v905
        %1249 = vmatprep.subr.mxu0 0.0
        %1250 = vmatpush1.msra.mxu0 %v906
        %1251 = vmatprep.subr.mxu0 0.0
        %1252 = vmatpush1.msra.mxu0 %v907
        %1253 = vmatprep.subr.mxu0 0.0
        %1254 = vmatpush1.msra.mxu0 %v908
        %1255 = vmatprep.subr.mxu0 0.0
        %1256 = vmatpush1.msra.mxu0 %v909
        %1257 = vmatprep.subr.mxu0 0.0
        %1258 = vmatpush1.msra.mxu0 %v910
        %1259 = vmatprep.subr.mxu0 0.0
        %1260 = vmatpush1.msra.mxu0 %v911
        %1261 = vmatprep.subr.mxu0 0.0
        %1262 = vmatpush1.msra.mxu0 %v912
        %1263 = vmatprep.subr.mxu0 0.0
        %1264 = vmatpush1.msra.mxu0 %v913
        %1265 = vmatprep.subr.mxu0 0.0
        %1266 = vmatpush1.msra.mxu0 %v914
        %1267 = vmatprep.subr.mxu0 0.0
        %1268 = vmatpush1.msra.mxu0 %v915
        %1269 = vmatprep.subr.mxu0 0.0
        %1270 = vmatpush1.msra.mxu0 %v916
        %1271 = vmatprep.subr.mxu0 0.0
        %1272 = vmatpush1.msra.mxu0 %v917
        %1273 = vmatprep.subr.mxu0 0.0
        %1274 = vmatpush1.msra.mxu0 %v918
        %1275 = vmatprep.subr.mxu0 0.0
        %1276 = vmatpush1.msra.mxu0 %v919
        %1277 = vmatprep.subr.mxu0 0.0
        %1278 = vmatpush1.msra.mxu0 %v920
        %1279 = vmatprep.subr.mxu0 0.0
        %1280 = vmatpush1.msra.mxu0 %v921
        %1281 = vmatprep.subr.mxu0 0.0
        %1282 = vmatpush1.msra.mxu0 %v922
        %1283 = vmatprep.subr.mxu0 0.0
        %1284 = vmatpush1.msra.mxu0 %v923
        %1285 = vmatprep.subr.mxu0 0.0
        %1286 = vmatpush1.msra.mxu0 %v924
        %1287 = vmatprep.subr.mxu0 0.0
        %1288 = vmatpush1.msra.mxu0 %v925
        %1289 = vmatprep.subr.mxu0 0.0
        %1290 = vmatpush1.msra.mxu0 %v926
        %1291 = vmatprep.subr.mxu0 0.0
        %1292 = vmatpush1.msra.mxu0 %v927
        %1293 = vmatprep.subr.mxu0 0.0
        %1294 = vmatpush1.msra.mxu0 %v928
        %1295 = vmatprep.subr.mxu0 0.0
        %1296 = vmatpush1.msra.mxu0 %v929
        %1297 = vmatprep.subr.mxu0 0.0
        %1298 = vmatpush1.msra.mxu0 %v930
        %1299 = vmatprep.subr.mxu0 0.0
        %1300 = vmatpush1.msra.mxu0 %v931
        %1301 = vmatprep.subr.mxu0 0.0
        %1302 = vmatpush1.msra.mxu0 %v932
        %1303 = vmatprep.mubr.f32.mxu0 %v864
        %1304 = vmatmul.mubr.f32.gmra.mrb[0].mxu0 %v863
        %v1305 = vpop.f32.mrb[0].mxu0
        %v1306 = vadd.f32 %v1231, %v1305
        %v1307 = vpop.f32.mrb[0].mxu0
        %1308 = vmatprep.mubr.f32.mxu0 %v868
        %1309 = vmatmul.mubr.f32.gmra.mrb[0].mxu0 %v867
        %v1310 = vpop.f32.mrb[0].mxu0
        %v1311 = vadd.f32 %v1236, %v1310
        %v1312 = vpop.f32.mrb[0].mxu0
        %1313 = vdwg.mxu0
        %v1314 = vadd.f32 %v480, %v746
        %v1315 = vadd.f32 %v482, %v748
        %v1316 = vadd.f32 %v577, %v843
        %v1317 = vadd.f32 %v579, %v845
        %v1318 = vadd.f32 %v486, %v752
        %v1319 = vadd.f32 %v488, %v754
        %v1320 = vadd.f32 %v583, %v849
        %v1321 = vadd.f32 %v585, %v851
        %v1322 = vmax.f32 %v1314, 0.0
        %v1323 = vmax.f32 %v1315, 0.0
        %v1324 = vmax.f32 %v1316, 0.0
        %v1325 = vmax.f32 %v1317, 0.0
        %v1326 = vmax.f32 %v1318, 0.0
        %v1327 = vmax.f32 %v1319, 0.0
        %v1328 = vmax.f32 %v1320, 0.0
        %v1329 = vmax.f32 %v1321, 0.0
        %s1330 = scalar_lea.vmem %s4, 1024
        %v1331 = vld [vmem:[%s1330] sm:$0xff]
        %v1332 = vld [vmem:[%s1330 + $0x8] sm:$0xff]
        %v1333 = vld [vmem:[%s1330 + $0x10] sm:$0xff]
        %v1334 = vld [vmem:[%s1330 + $0x18] sm:$0xff]
        %v1335 = vld [vmem:[%s1330 + $0x20] sm:$0xff]
        %v1336 = vld [vmem:[%s1330 + $0x28] sm:$0xff]
        %v1337 = vld [vmem:[%s1330 + $0x30] sm:$0xff]
        %v1338 = vld [vmem:[%s1330 + $0x38] sm:$0xff]
        %v1339 = vld [vmem:[%s1330 + $0x40] sm:$0xff]
        %v1340 = vld [vmem:[%s1330 + $0x48] sm:$0xff]
        %v1341 = vld [vmem:[%s1330 + $0x50] sm:$0xff]
        %v1342 = vld [vmem:[%s1330 + $0x58] sm:$0xff]
        %v1343 = vld [vmem:[%s1330 + $0x60] sm:$0xff]
        %v1344 = vld [vmem:[%s1330 + $0x68] sm:$0xff]
        %v1345 = vld [vmem:[%s1330 + $0x70] sm:$0xff]
        %v1346 = vld [vmem:[%s1330 + $0x78] sm:$0xff]
        %v1347 = vld [vmem:[%s1330 + $0x80] sm:$0xff]
        %v1348 = vld [vmem:[%s1330 + $0x88] sm:$0xff]
        %v1349 = vld [vmem:[%s1330 + $0x90] sm:$0xff]
        %v1350 = vld [vmem:[%s1330 + $0x98] sm:$0xff]
        %v1351 = vld [vmem:[%s1330 + $0xa0] sm:$0xff]
        %v1352 = vld [vmem:[%s1330 + $0xa8] sm:$0xff]
        %v1353 = vld [vmem:[%s1330 + $0xb0] sm:$0xff]
        %v1354 = vld [vmem:[%s1330 + $0xb8] sm:$0xff]
        %v1355 = vld [vmem:[%s1330 + $0xc0] sm:$0xff]
        %v1356 = vld [vmem:[%s1330 + $0xc8] sm:$0xff]
        %v1357 = vld [vmem:[%s1330 + $0xd0] sm:$0xff]
        %v1358 = vld [vmem:[%s1330 + $0xd8] sm:$0xff]
        %v1359 = vld [vmem:[%s1330 + $0xe0] sm:$0xff]
        %v1360 = vld [vmem:[%s1330 + $0xe8] sm:$0xff]
        %v1361 = vld [vmem:[%s1330 + $0xf0] sm:$0xff]
        %v1362 = vld [vmem:[%s1330 + $0xf8] sm:$0xff]
        %v1363 = vld [vmem:[%s1330 + $0x100] sm:$0xff]
        %v1364 = vld [vmem:[%s1330 + $0x108] sm:$0xff]
        %v1365 = vld [vmem:[%s1330 + $0x110] sm:$0xff]
        %v1366 = vld [vmem:[%s1330 + $0x118] sm:$0xff]
        %v1367 = vld [vmem:[%s1330 + $0x120] sm:$0xff]
        %v1368 = vld [vmem:[%s1330 + $0x128] sm:$0xff]
        %v1369 = vld [vmem:[%s1330 + $0x130] sm:$0xff]
        %v1370 = vld [vmem:[%s1330 + $0x138] sm:$0xff]
        %v1371 = vld [vmem:[%s1330 + $0x140] sm:$0xff]
        %v1372 = vld [vmem:[%s1330 + $0x148] sm:$0xff]
        %v1373 = vld [vmem:[%s1330 + $0x150] sm:$0xff]
        %v1374 = vld [vmem:[%s1330 + $0x158] sm:$0xff]
        %v1375 = vld [vmem:[%s1330 + $0x160] sm:$0xff]
        %v1376 = vld [vmem:[%s1330 + $0x168] sm:$0xff]
        %v1377 = vld [vmem:[%s1330 + $0x170] sm:$0xff]
        %v1378 = vld [vmem:[%s1330 + $0x178] sm:$0xff]
        %v1379 = vld [vmem:[%s1330 + $0x180] sm:$0xff]
        %v1380 = vld [vmem:[%s1330 + $0x188] sm:$0xff]
        %v1381 = vld [vmem:[%s1330 + $0x190] sm:$0xff]
        %v1382 = vld [vmem:[%s1330 + $0x198] sm:$0xff]
        %v1383 = vld [vmem:[%s1330 + $0x1a0] sm:$0xff]
        %v1384 = vld [vmem:[%s1330 + $0x1a8] sm:$0xff]
        %v1385 = vld [vmem:[%s1330 + $0x1b0] sm:$0xff]
        %v1386 = vld [vmem:[%s1330 + $0x1b8] sm:$0xff]
        %v1387 = vld [vmem:[%s1330 + $0x1c0] sm:$0xff]
        %v1388 = vld [vmem:[%s1330 + $0x1c8] sm:$0xff]
        %v1389 = vld [vmem:[%s1330 + $0x1d0] sm:$0xff]
        %v1390 = vld [vmem:[%s1330 + $0x1d8] sm:$0xff]
        %v1391 = vld [vmem:[%s1330 + $0x1e0] sm:$0xff]
        %v1392 = vld [vmem:[%s1330 + $0x1e8] sm:$0xff]
        %v1393 = vld [vmem:[%s1330 + $0x1f0] sm:$0xff]
        %v1394 = vld [vmem:[%s1330 + $0x1f8] sm:$0xff]
        %1395 = vmatprep.subr.mxu0 0.0
        %1396 = vmatpush1.msra.mxu0 %v1331
        %1397 = vmatprep.subr.mxu0 0.0
        %1398 = vmatpush1.msra.mxu0 %v1332
        %1399 = vmatprep.subr.mxu0 0.0
        %1400 = vmatpush1.msra.mxu0 %v1333
        %1401 = vmatprep.subr.mxu0 0.0
        %1402 = vmatpush1.msra.mxu0 %v1334
        %1403 = vmatprep.subr.mxu0 0.0
        %1404 = vmatpush1.msra.mxu0 %v1335
        %1405 = vmatprep.subr.mxu0 0.0
        %1406 = vmatpush1.msra.mxu0 %v1336
        %1407 = vmatprep.subr.mxu0 0.0
        %1408 = vmatpush1.msra.mxu0 %v1337
        %1409 = vmatprep.subr.mxu0 0.0
        %1410 = vmatpush1.msra.mxu0 %v1338
        %1411 = vmatprep.subr.mxu0 0.0
        %1412 = vmatpush1.msra.mxu0 %v1339
        %1413 = vmatprep.subr.mxu0 0.0
        %1414 = vmatpush1.msra.mxu0 %v1340
        %1415 = vmatprep.subr.mxu0 0.0
        %1416 = vmatpush1.msra.mxu0 %v1341
        %1417 = vmatprep.subr.mxu0 0.0
        %1418 = vmatpush1.msra.mxu0 %v1342
        %1419 = vmatprep.subr.mxu0 0.0
        %1420 = vmatpush1.msra.mxu0 %v1343
        %1421 = vmatprep.subr.mxu0 0.0
        %1422 = vmatpush1.msra.mxu0 %v1344
        %1423 = vmatprep.subr.mxu0 0.0
        %1424 = vmatpush1.msra.mxu0 %v1345
        %1425 = vmatprep.subr.mxu0 0.0
        %1426 = vmatpush1.msra.mxu0 %v1346
        %1427 = vmatprep.subr.mxu0 0.0
        %1428 = vmatpush1.msra.mxu0 %v1347
        %1429 = vmatprep.subr.mxu0 0.0
        %1430 = vmatpush1.msra.mxu0 %v1348
        %1431 = vmatprep.subr.mxu0 0.0
        %1432 = vmatpush1.msra.mxu0 %v1349
        %1433 = vmatprep.subr.mxu0 0.0
        %1434 = vmatpush1.msra.mxu0 %v1350
        %1435 = vmatprep.subr.mxu0 0.0
        %1436 = vmatpush1.msra.mxu0 %v1351
        %1437 = vmatprep.subr.mxu0 0.0
        %1438 = vmatpush1.msra.mxu0 %v1352
        %1439 = vmatprep.subr.mxu0 0.0
        %1440 = vmatpush1.msra.mxu0 %v1353
        %1441 = vmatprep.subr.mxu0 0.0
        %1442 = vmatpush1.msra.mxu0 %v1354
        %1443 = vmatprep.subr.mxu0 0.0
        %1444 = vmatpush1.msra.mxu0 %v1355
        %1445 = vmatprep.subr.mxu0 0.0
        %1446 = vmatpush1.msra.mxu0 %v1356
        %1447 = vmatprep.subr.mxu0 0.0
        %1448 = vmatpush1.msra.mxu0 %v1357
        %1449 = vmatprep.subr.mxu0 0.0
        %1450 = vmatpush1.msra.mxu0 %v1358
        %1451 = vmatprep.subr.mxu0 0.0
        %1452 = vmatpush1.msra.mxu0 %v1359
        %1453 = vmatprep.subr.mxu0 0.0
        %1454 = vmatpush1.msra.mxu0 %v1360
        %1455 = vmatprep.subr.mxu0 0.0
        %1456 = vmatpush1.msra.mxu0 %v1361
        %1457 = vmatprep.subr.mxu0 0.0
        %1458 = vmatpush1.msra.mxu0 %v1362
        %1459 = vmatprep.mubr.f32.mxu0 %v1323
        %1460 = vmatmul.mubr.f32.gmra.mrb[0].mxu0 %v1322
        %v1461 = vpop.f32.mrb[0].mxu0
        %v1462 = vadd.f32 0.0, %v1461
        %v1463 = vpop.f32.mrb[0].mxu0
        %1464 = vmatprep.mubr.f32.mxu0 %v1327
        %1465 = vmatmul.mubr.f32.gmra.mrb[0].mxu0 %v1326
        %v1466 = vpop.f32.mrb[0].mxu0
        %v1467 = vadd.f32 0.0, %v1466
        %v1468 = vpop.f32.mrb[0].mxu0
        %1469 = vdwg.mxu0
        %1470 = vmatprep.subr.mxu0 0.0
        %1471 = vmatpush1.msra.mxu0 %v1363
        %1472 = vmatprep.subr.mxu0 0.0
        %1473 = vmatpush1.msra.mxu0 %v1364
        %1474 = vmatprep.subr.mxu0 0.0
        %1475 = vmatpush1.msra.mxu0 %v1365
        %1476 = vmatprep.subr.mxu0 0.0
        %1477 = vmatpush1.msra.mxu0 %v1366
        %1478 = vmatprep.subr.mxu0 0.0
        %1479 = vmatpush1.msra.mxu0 %v1367
        %1480 = vmatprep.subr.mxu0 0.0
        %1481 = vmatpush1.msra.mxu0 %v1368
        %1482 = vmatprep.subr.mxu0 0.0
        %1483 = vmatpush1.msra.mxu0 %v1369
        %1484 = vmatprep.subr.mxu0 0.0
        %1485 = vmatpush1.msra.mxu0 %v1370
        %1486 = vmatprep.subr.mxu0 0.0
        %1487 = vmatpush1.msra.mxu0 %v1371
        %1488 = vmatprep.subr.mxu0 0.0
        %1489 = vmatpush1.msra.mxu0 %v1372
        %1490 = vmatprep.subr.mxu0 0.0
        %1491 = vmatpush1.msra.mxu0 %v1373
        %1492 = vmatprep.subr.mxu0 0.0
        %1493 = vmatpush1.msra.mxu0 %v1374
        %1494 = vmatprep.subr.mxu0 0.0
        %1495 = vmatpush1.msra.mxu0 %v1375
        %1496 = vmatprep.subr.mxu0 0.0
        %1497 = vmatpush1.msra.mxu0 %v1376
        %1498 = vmatprep.subr.mxu0 0.0
        %1499 = vmatpush1.msra.mxu0 %v1377
        %1500 = vmatprep.subr.mxu0 0.0
        %1501 = vmatpush1.msra.mxu0 %v1378
        %1502 = vmatprep.subr.mxu0 0.0
        %1503 = vmatpush1.msra.mxu0 %v1379
        %1504 = vmatprep.subr.mxu0 0.0
        %1505 = vmatpush1.msra.mxu0 %v1380
        %1506 = vmatprep.subr.mxu0 0.0
        %1507 = vmatpush1.msra.mxu0 %v1381
        %1508 = vmatprep.subr.mxu0 0.0
        %1509 = vmatpush1.msra.mxu0 %v1382
        %1510 = vmatprep.subr.mxu0 0.0
        %1511 = vmatpush1.msra.mxu0 %v1383
        %1512 = vmatprep.subr.mxu0 0.0
        %1513 = vmatpush1.msra.mxu0 %v1384
        %1514 = vmatprep.subr.mxu0 0.0
        %1515 = vmatpush1.msra.mxu0 %v1385
        %1516 = vmatprep.subr.mxu0 0.0
        %1517 = vmatpush1.msra.mxu0 %v1386
        %1518 = vmatprep.subr.mxu0 0.0
        %1519 = vmatpush1.msra.mxu0 %v1387
        %1520 = vmatprep.subr.mxu0 0.0
        %1521 = vmatpush1.msra.mxu0 %v1388
        %1522 = vmatprep.subr.mxu0 0.0
        %1523 = vmatpush1.msra.mxu0 %v1389
        %1524 = vmatprep.subr.mxu0 0.0
        %1525 = vmatpush1.msra.mxu0 %v1390
        %1526 = vmatprep.subr.mxu0 0.0
        %1527 = vmatpush1.msra.mxu0 %v1391
        %1528 = vmatprep.subr.mxu0 0.0
        %1529 = vmatpush1.msra.mxu0 %v1392
        %1530 = vmatprep.subr.mxu0 0.0
        %1531 = vmatpush1.msra.mxu0 %v1393
        %1532 = vmatprep.subr.mxu0 0.0
        %1533 = vmatpush1.msra.mxu0 %v1394
        %1534 = vmatprep.mubr.f32.mxu0 %v1325
        %1535 = vmatmul.mubr.f32.gmra.mrb[0].mxu0 %v1324
        %v1536 = vpop.f32.mrb[0].mxu0
        %v1537 = vadd.f32 %v1462, %v1536
        %v1538 = vpop.f32.mrb[0].mxu0
        %1539 = vmatprep.mubr.f32.mxu0 %v1329
        %1540 = vmatmul.mubr.f32.gmra.mrb[0].mxu0 %v1328
        %v1541 = vpop.f32.mrb[0].mxu0
        %v1542 = vadd.f32 %v1467, %v1541
        %v1543 = vpop.f32.mrb[0].mxu0
        %1544 = vdwg.mxu0
        %v1545 = vadd.f32 %v1306, %v1537
        %v1546 = vadd.f32 %v1311, %v1542
        %v1547 = vld [vmem:[%s5] sm:$0x1]
        %v1549 = vlaneseq
        %v1550 = vshrl.u32 %v1549, 7
        %v1551 = vsub.s32 0, %v1550
        %v1552 = vrot.slane %v1547, %v1551
        %v1554 = vadd.f32 %v1545, %v1552
        %v1555 = vadd.f32 %v1546, %v1552
        %1556 = vst [vmem:[%s307] sm:$0xff] %v1554
        %1557 = vst [vmem:[%s307 + $0x8] sm:$0xff] %v1555
        %s1558 = smul.u32 2, %s17
        %p1559 = scmp.lt.s32.totalorder %s1558, 5
        %s1560 = scalar_select %p1559, %s1558, 5
        %s1561 = smul.addr %s1560, 8
        %s1562 = scalar_lea.vmem %s6, %s1561
        // Predicated region
        $region83: #{vcop_header.1} parent=77 // pred_check
          %p1563 = pneg %p166
        $region84: #{vcop_header.1} parent=77 // pred_check_branch
          %1565 = sbr.rel (%p1563) target = $region86
        $region85: #{vcop_header.1} parent=77 // pred_region
          %s1566 = smul.u32 2, %s17
        $region86: #{vcop_header.1} parent=77 // pred_fallthru
          _
      $region78: #{vcop_header.1} parent=5 // pred_fallthru
        _
      %p1567 = scmp.le.s32.totalorder 2, %s12
      // Predicated region
      $region87: #{vcop_header.1} parent=5 // pred_check
        %p1568 = pneg %p1567
      $region88: #{vcop_header.1} parent=5 // pred_check_branch
        %1570 = sbr.rel (%p1568) target = $region90
      $region89: #{vcop_header.1} parent=5 // pred_region
        %s1571 = ssub.s32 %s12, 2
        // Predicated region
        $region91: #{vcop_header.1} parent=89 // pred_check
          %p1572 = pneg %p172
        $region92: #{vcop_header.1} parent=89 // pred_check_branch
          %1574 = sbr.rel (%p1572) target = $region94
        $region93: #{vcop_header.1} parent=89 // pred_region
          %s1575 = smul.u32 2, %s18
          %p1576 = scmp.lt.s32.totalorder %s1575, 5
          %s1577 = scalar_select %p1576, %s1575, 5
          %s1578 = smul.addr %s1577, 8
          %s1579 = scalar_lea.vmem %s6, %s1578
        $region94: #{vcop_header.1} parent=89 // pred_fallthru
          _
      $region90: #{vcop_header.1} parent=5 // pred_fallthru
        _
    $region6: #{vcop_header.1} parent=1 // loop_footer
      %s16 = sadd.s32 1, %s12
    $region7: #{vcop_header.1} parent=1 // loop_footer_branch
      %11 = sbr.rel target = $region3
    $region8: #{vcop_header.1} parent=1 // loop_exit
      _

</llo_original>
